<compile_context>
chip_gen: v5e
topology: v5e:2x2
jax: 0.10.0
libtpu: 0.0.40
codegen_flags: <defaults>
</compile_context>

<pallas_src>
import jax
import jax.numpy as jnp
from jax import lax
from jax.experimental import pallas as pl
from jax.experimental.pallas import tpu as pltpu

SCALE = 0.20452644621056035
DROP_P = 0.8
KEEP_SCALE = 1.0 / (1.0 - DROP_P)                  # 5.0
DROP_THRESHOLD = int(round(DROP_P * (1 << 32)))    # keep iff bits >= this


def _slab_compute(a_f32, k_f32, bits_u32):
    """One (S,D) slab: softmax(a @ k^T * SCALE) -> dropout -> @ k."""
    a = a_f32.astype(jnp.bfloat16)                 # MXU feeds in bf16
    k = k_f32.astype(jnp.bfloat16)
    # scores: contract the feature dims directly (no transpose materialized),
    # accumulate in f32 on the MXU.
    s = lax.dot_general(a, k, (((1,), (1,)), ((), ())),
                        preferred_element_type=jnp.float32) * SCALE
    m = jnp.max(s, axis=-1, keepdims=True)
    e = jnp.exp(s - m)                             # unnormalized softmax (f32)
    denom = jnp.sum(e, axis=-1, keepdims=True)
    # EUP approx reciprocal; softmax normalization and the dropout 1/(1-p)
    # scale fold into one per-row factor applied after the second matmul.
    row_scale = pl.reciprocal(denom, approx=True) * KEEP_SCALE
    keep = bits_u32 >= jnp.uint32(DROP_THRESHOLD)  # P(keep) = 1 - p
    d = jnp.where(keep, e, 0.0).astype(jnp.bfloat16)
    o = lax.dot_general(d, k, (((1,), (0,)), ((), ())),
                        preferred_element_type=jnp.float32)
    return o * row_scale


def _kernel_host_bits(x1_ref, x2_ref, bits_ref, o_ref):
    # Per-slab (compile-time-unrolled) processing keeps ~15-20 vregs live.
    bt = x1_ref.shape[0]
    for i in range(bt):
        o_ref[i] = _slab_compute(x1_ref[i], x2_ref[i],
                                 bits_ref[i]).astype(o_ref.dtype)


def _kernel_prng(seed_ref, x1_ref, x2_ref, o_ref):
    # Decorrelate grid steps (on v7x the 2 blocks run on different cores).
    pltpu.prng_seed(seed_ref[0] + pl.program_id(0))
    bt, s_len, _ = x1_ref.shape
    for i in range(bt):
        bits = pltpu.bitcast(pltpu.prng_random_bits((s_len, s_len)),
                             jnp.uint32)
        o_ref[i] = _slab_compute(x1_ref[i], x2_ref[i],
                                 bits).astype(o_ref.dtype)


def _grid_config(nb):
    """1 grid step on single-TC chips (v5e/v6e/v4); 2 CORE_PARALLEL steps on
    v7x so the two TensorCores actually split the work."""
    try:
        kind = jax.devices()[0].device_kind.lower()
    except Exception:
        kind = ""
    multi_tc = ("v7" in kind) or ("7x" in kind)
    if multi_tc and nb % 2 == 0:
        core_parallel = getattr(pltpu, "CORE_PARALLEL", "parallel")
        return 2, (core_parallel,)
    return 1, ("arbitrary",)


def model_forward_with_bits(x1, x2, bits):
    """Verification path: dropout bits supplied by the host ((B*C,S,S) u32)."""
    B, C, S, D = x1.shape
    nb = B * C
    x1f = x1.reshape(nb, S, D)
    x2f = x2.reshape(nb, S, D)
    nsteps, semantics = _grid_config(nb)
    bt = nb // nsteps

    out = pl.pallas_call(
        _kernel_host_bits,
        out_shape=jax.ShapeDtypeStruct((nb, S, D), x1.dtype),
        grid_spec=pltpu.PrefetchScalarGridSpec(
            num_scalar_prefetch=0,
            grid=(nsteps,),
            in_specs=[
                pl.BlockSpec((bt, S, D), lambda i: (i, 0, 0)),
                pl.BlockSpec((bt, S, D), lambda i: (i, 0, 0)),
                pl.BlockSpec((bt, S, S), lambda i: (i, 0, 0)),
            ],
            out_specs=pl.BlockSpec((bt, S, D), lambda i: (i, 0, 0)),
        ),
        compiler_params=pltpu.CompilerParams(dimension_semantics=semantics),
    )(x1f, x2f, bits)
    return out.reshape(B, C, S, D)


def model_forward(x1, x2, seed=0):
    """Production path: dropout bits generated in-kernel (TPU PRNG)."""
    B, C, S, D = x1.shape
    nb = B * C
    x1f = x1.reshape(nb, S, D)
    x2f = x2.reshape(nb, S, D)
    nsteps, semantics = _grid_config(nb)
    bt = nb // nsteps
    seed_arr = jnp.asarray([seed], dtype=jnp.int32)

    try:
        out = pl.pallas_call(
            _kernel_prng,
            out_shape=jax.ShapeDtypeStruct((nb, S, D), x1.dtype),
            grid_spec=pltpu.PrefetchScalarGridSpec(
                num_scalar_prefetch=1,
                grid=(nsteps,),
                in_specs=[
                    pl.BlockSpec((bt, S, D), lambda i, s: (i, 0, 0)),
                    pl.BlockSpec((bt, S, D), lambda i, s: (i, 0, 0)),
                ],
                out_specs=pl.BlockSpec((bt, S, D), lambda i, s: (i, 0, 0)),
            ),
            compiler_params=pltpu.CompilerParams(
                dimension_semantics=semantics),
        )(seed_arr, x1f, x2f)
        jax.block_until_ready(out)
        return out.reshape(B, C, S, D)
    except Exception:
        # TODO(synk): TPU PRNG primitives have no interpret-mode lowering;
        # fall back to host-generated bits so the model still runs there.
        bits = jax.random.bits(jax.random.PRNGKey(seed), shape=(nb, S, S),
                               dtype=jnp.uint32)
        return model_forward_with_bits(x1, x2, bits)


def reference(x1, x2, bits):
    """Pure-JAX reference for the PyTorch model. Matmul operands are mirrored
    in bf16 (f32 accumulation) to match the kernel's MXU numerics."""
    B, C, S, D = x1.shape
    a = x1.astype(jnp.bfloat16)
    k = x2.astype(jnp.bfloat16)
    s = jnp.einsum("bcqd,bckd->bcqk", a, k,
                   preferred_element_type=jnp.float32) * SCALE
    p = jax.nn.softmax(s, axis=-1)
    keep = bits.reshape(B, C, S, S) >= jnp.uint32(DROP_THRESHOLD)
    d = jnp.where(keep, p * KEEP_SCALE, 0.0).astype(jnp.bfloat16)
    return jnp.einsum("bcqk,bckd->bcqd", d, k,
                      preferred_element_type=jnp.float32)


if __name__ == "__main__":
    key = jax.random.PRNGKey(0)
    k1, k2, kdrop = jax.random.split(key, 3)
    B, C, S, D = 2, 3, 64, 64
    x1 = jax.random.normal(k1, (B, C, S, D), dtype=jnp.float32)
    x2 = jax.random.normal(k2, (B, C, S, D), dtype=jnp.float32)

    # Verification: host-side dropout bits so the exact mask is shared with
    # the pure-JAX reference.
    bits = jax.random.bits(kdrop, shape=(B * C, S, S), dtype=jnp.uint32)
    out = model_forward_with_bits(x1, x2, bits)
    jax.block_until_ready(out)
    assert out.shape == (B, C, S, D)
    assert bool(jnp.all(jnp.isfinite(out)))
    ref = reference(x1, x2, bits)
    # Tolerance covers approx-reciprocal (~1e-3) and normalize-after-matmul
    # vs normalize-before rounding differences (~1e-2 with bf16 feeds).
    assert bool(jnp.allclose(out, ref, rtol=3e-2, atol=3e-2)), \
        "mismatch vs JAX reference"

    # Production path: dropout bits generated in-kernel (no (nb,S,S) uint32
    # HBM stream). RNG stream is kernel-defined, so only sanity checks here.
    out2 = model_forward(x1, x2, seed=1234)
    jax.block_until_ready(out2)
    assert out2.shape == (B, C, S, D)
    assert bool(jnp.all(jnp.isfinite(out2)))

    print("KERNEL_OK")
</pallas_src>

<mosaic_0001>
module attributes {stable_mosaic.version = 11 : i64} {
  func.func @_kernel_host_bits(%arg0: i32, %arg1: memref<6x64x64xf32, #tpu.memory_space<vmem>>, %arg2: memref<6x64x64xf32, #tpu.memory_space<vmem>>, %arg3: memref<6x64x64xi32, #tpu.memory_space<vmem>>, %arg4: memref<6x64x64xf32, #tpu.memory_space<vmem>>) attributes {dimension_semantics = [#tpu.dimension_semantics<arbitrary>], iteration_bounds = array<i64: 1>, scalar_prefetch = 0 : i64, scratch_operands = 0 : i64, tpu.core_type = #tpu.core_type<tc>, window_params = [{transform_indices = @transform_0, window_bounds = array<i64: 6, 64, 64>}, {transform_indices = @transform_1, window_bounds = array<i64: 6, 64, 64>}, {transform_indices = @transform_2, window_bounds = array<i64: 6, 64, 64>}, {transform_indices = @transform_3, window_bounds = array<i64: 6, 64, 64>}]} {
    %c0 = arith.constant 0 : index
    %c0_0 = arith.constant 0 : index
    %c0_1 = arith.constant 0 : index
    %0 = vector.load %arg1[%c0, %c0_0, %c0_1] : memref<6x64x64xf32, #tpu.memory_space<vmem>>, vector<1x64x64xf32>
    %1 = vector.shape_cast %0 : vector<1x64x64xf32> to vector<64x64xf32>
    %c0_2 = arith.constant 0 : index
    %c0_3 = arith.constant 0 : index
    %c0_4 = arith.constant 0 : index
    %2 = vector.load %arg2[%c0_2, %c0_3, %c0_4] : memref<6x64x64xf32, #tpu.memory_space<vmem>>, vector<1x64x64xf32>
    %3 = vector.shape_cast %2 : vector<1x64x64xf32> to vector<64x64xf32>
    %c0_5 = arith.constant 0 : index
    %c0_6 = arith.constant 0 : index
    %c0_7 = arith.constant 0 : index
    %4 = vector.load %arg3[%c0_5, %c0_6, %c0_7] : memref<6x64x64xi32, #tpu.memory_space<vmem>>, vector<1x64x64xi32>
    %5 = vector.shape_cast %4 : vector<1x64x64xi32> to vector<64x64xi32>
    %6 = arith.truncf %1 : vector<64x64xf32> to vector<64x64xbf16>
    %7 = arith.truncf %3 : vector<64x64xf32> to vector<64x64xbf16>
    %cst = arith.constant dense<0.000000e+00> : vector<64x64xf32>
    %8 = tpu.matmul %6, %7, %cst {dimension_numbers = #tpu.dot_dimension_numbers<[1], [1], [0], [0], [0, 0, 1, 0], [], []>} : vector<64x64xbf16>, vector<64x64xbf16>, vector<64x64xf32> -> vector<64x64xf32>
    %cst_8 = arith.constant 0.204526439 : f32
    %9 = vector.broadcast %cst_8 : f32 to vector<64x64xf32>
    %10 = arith.mulf %8, %9 : vector<64x64xf32>
    %cst_9 = arith.constant dense<0xFF800000> : vector<64xf32>
    %11 = vector.multi_reduction <maximumf>, %10, %cst_9 [1] : vector<64x64xf32> to vector<64xf32>
    %12 = vector.shape_cast %11 : vector<64xf32> to vector<64x1xf32>
    %13 = vector.broadcast %12 : vector<64x1xf32> to vector<64x64xf32>
    %14 = arith.subf %10, %13 : vector<64x64xf32>
    %15 = math.exp %14 : vector<64x64xf32>
    %cst_10 = arith.constant dense<0.000000e+00> : vector<64xf32>
    %16 = vector.multi_reduction <add>, %15, %cst_10 [1] : vector<64x64xf32> to vector<64xf32>
    %17 = vector.shape_cast %16 : vector<64xf32> to vector<64x1xf32>
    %18 = tpu.reciprocal %17 {approx = true} : vector<64x1xf32> -> vector<64x1xf32>
    %cst_11 = arith.constant 5.000000e+00 : f32
    %19 = vector.broadcast %cst_11 : f32 to vector<64x1xf32>
    %20 = arith.mulf %18, %19 : vector<64x1xf32>
    %c-858993459_i32 = arith.constant -858993459 : i32
    %21 = vector.broadcast %c-858993459_i32 : i32 to vector<64x64xi32>
    %22 = arith.cmpi uge, %5, %21 : vector<64x64xi32>
    %cst_12 = arith.constant 0.000000e+00 : f32
    %23 = vector.broadcast %cst_12 : f32 to vector<64x64xf32>
    %24 = arith.select %22, %15, %23 : vector<64x64xi1>, vector<64x64xf32>
    %25 = arith.truncf %24 : vector<64x64xf32> to vector<64x64xbf16>
    %cst_13 = arith.constant dense<0.000000e+00> : vector<64x64xf32>
    %26 = tpu.matmul %25, %7, %cst_13 {dimension_numbers = #tpu.dot_dimension_numbers<[1], [0], [0], [1], [0, 0, 1, 1], [], []>} : vector<64x64xbf16>, vector<64x64xbf16>, vector<64x64xf32> -> vector<64x64xf32>
    %27 = vector.broadcast %20 : vector<64x1xf32> to vector<64x64xf32>
    %28 = arith.mulf %26, %27 : vector<64x64xf32>
    %c0_14 = arith.constant 0 : index
    %c0_15 = arith.constant 0 : index
    %c0_16 = arith.constant 0 : index
    %29 = vector.load %arg4[%c0_14, %c0_15, %c0_16] : memref<6x64x64xf32, #tpu.memory_space<vmem>>, vector<1x64x64xf32>
    %30 = vector.shape_cast %29 : vector<1x64x64xf32> to vector<64x64xf32>
    %31 = vector.shape_cast %28 : vector<64x64xf32> to vector<1x64x64xf32>
    tpu.vector_store %arg4[%c0_14, %c0_15, %c0_16], %31 {strides = array<i32>} : memref<6x64x64xf32, #tpu.memory_space<vmem>>, vector<1x64x64xf32>,
    %c1 = arith.constant 1 : index
    %c0_17 = arith.constant 0 : index
    %c0_18 = arith.constant 0 : index
    %32 = vector.load %arg1[%c1, %c0_17, %c0_18] : memref<6x64x64xf32, #tpu.memory_space<vmem>>, vector<1x64x64xf32>
    %33 = vector.shape_cast %32 : vector<1x64x64xf32> to vector<64x64xf32>
    %c1_19 = arith.constant 1 : index
    %c0_20 = arith.constant 0 : index
    %c0_21 = arith.constant 0 : index
    %34 = vector.load %arg2[%c1_19, %c0_20, %c0_21] : memref<6x64x64xf32, #tpu.memory_space<vmem>>, vector<1x64x64xf32>
    %35 = vector.shape_cast %34 : vector<1x64x64xf32> to vector<64x64xf32>
    %c1_22 = arith.constant 1 : index
    %c0_23 = arith.constant 0 : index
    %c0_24 = arith.constant 0 : index
    %36 = vector.load %arg3[%c1_22, %c0_23, %c0_24] : memref<6x64x64xi32, #tpu.memory_space<vmem>>, vector<1x64x64xi32>
    %37 = vector.shape_cast %36 : vector<1x64x64xi32> to vector<64x64xi32>
    %38 = arith.truncf %33 : vector<64x64xf32> to vector<64x64xbf16>
    %39 = arith.truncf %35 : vector<64x64xf32> to vector<64x64xbf16>
    %cst_25 = arith.constant dense<0.000000e+00> : vector<64x64xf32>
    %40 = tpu.matmul %38, %39, %cst_25 {dimension_numbers = #tpu.dot_dimension_numbers<[1], [1], [0], [0], [0, 0, 1, 0], [], []>} : vector<64x64xbf16>, vector<64x64xbf16>, vector<64x64xf32> -> vector<64x64xf32>
    %cst_26 = arith.constant 0.204526439 : f32
    %41 = vector.broadcast %cst_26 : f32 to vector<64x64xf32>
    %42 = arith.mulf %40, %41 : vector<64x64xf32>
    %cst_27 = arith.constant dense<0xFF800000> : vector<64xf32>
    %43 = vector.multi_reduction <maximumf>, %42, %cst_27 [1] : vector<64x64xf32> to vector<64xf32>
    %44 = vector.shape_cast %43 : vector<64xf32> to vector<64x1xf32>
    %45 = vector.broadcast %44 : vector<64x1xf32> to vector<64x64xf32>
    %46 = arith.subf %42, %45 : vector<64x64xf32>
    %47 = math.exp %46 : vector<64x64xf32>
    %cst_28 = arith.constant dense<0.000000e+00> : vector<64xf32>
    %48 = vector.multi_reduction <add>, %47, %cst_28 [1] : vector<64x64xf32> to vector<64xf32>
    %49 = vector.shape_cast %48 : vector<64xf32> to vector<64x1xf32>
    %50 = tpu.reciprocal %49 {approx = true} : vector<64x1xf32> -> vector<64x1xf32>
    %cst_29 = arith.constant 5.000000e+00 : f32
    %51 = vector.broadcast %cst_29 : f32 to vector<64x1xf32>
    %52 = arith.mulf %50, %51 : vector<64x1xf32>
    %c-858993459_i32_30 = arith.constant -858993459 : i32
    %53 = vector.broadcast %c-858993459_i32_30 : i32 to vector<64x64xi32>
    %54 = arith.cmpi uge, %37, %53 : vector<64x64xi32>
    %cst_31 = arith.constant 0.000000e+00 : f32
    %55 = vector.broadcast %cst_31 : f32 to vector<64x64xf32>
    %56 = arith.select %54, %47, %55 : vector<64x64xi1>, vector<64x64xf32>
    %57 = arith.truncf %56 : vector<64x64xf32> to vector<64x64xbf16>
    %cst_32 = arith.constant dense<0.000000e+00> : vector<64x64xf32>
    %58 = tpu.matmul %57, %39, %cst_32 {dimension_numbers = #tpu.dot_dimension_numbers<[1], [0], [0], [1], [0, 0, 1, 1], [], []>} : vector<64x64xbf16>, vector<64x64xbf16>, vector<64x64xf32> -> vector<64x64xf32>
    %59 = vector.broadcast %52 : vector<64x1xf32> to vector<64x64xf32>
    %60 = arith.mulf %58, %59 : vector<64x64xf32>
    %c1_33 = arith.constant 1 : index
    %c0_34 = arith.constant 0 : index
    %c0_35 = arith.constant 0 : index
    %61 = vector.load %arg4[%c1_33, %c0_34, %c0_35] : memref<6x64x64xf32, #tpu.memory_space<vmem>>, vector<1x64x64xf32>
    %62 = vector.shape_cast %61 : vector<1x64x64xf32> to vector<64x64xf32>
    %63 = vector.shape_cast %60 : vector<64x64xf32> to vector<1x64x64xf32>
    tpu.vector_store %arg4[%c1_33, %c0_34, %c0_35], %63 {strides = array<i32>} : memref<6x64x64xf32, #tpu.memory_space<vmem>>, vector<1x64x64xf32>,
    %c2 = arith.constant 2 : index
    %c0_36 = arith.constant 0 : index
    %c0_37 = arith.constant 0 : index
    %64 = vector.load %arg1[%c2, %c0_36, %c0_37] : memref<6x64x64xf32, #tpu.memory_space<vmem>>, vector<1x64x64xf32>
    %65 = vector.shape_cast %64 : vector<1x64x64xf32> to vector<64x64xf32>
    %c2_38 = arith.constant 2 : index
    %c0_39 = arith.constant 0 : index
    %c0_40 = arith.constant 0 : index
    %66 = vector.load %arg2[%c2_38, %c0_39, %c0_40] : memref<6x64x64xf32, #tpu.memory_space<vmem>>, vector<1x64x64xf32>
    %67 = vector.shape_cast %66 : vector<1x64x64xf32> to vector<64x64xf32>
    %c2_41 = arith.constant 2 : index
    %c0_42 = arith.constant 0 : index
    %c0_43 = arith.constant 0 : index
    %68 = vector.load %arg3[%c2_41, %c0_42, %c0_43] : memref<6x64x64xi32, #tpu.memory_space<vmem>>, vector<1x64x64xi32>
    %69 = vector.shape_cast %68 : vector<1x64x64xi32> to vector<64x64xi32>
    %70 = arith.truncf %65 : vector<64x64xf32> to vector<64x64xbf16>
    %71 = arith.truncf %67 : vector<64x64xf32> to vector<64x64xbf16>
    %cst_44 = arith.constant dense<0.000000e+00> : vector<64x64xf32>
    %72 = tpu.matmul %70, %71, %cst_44 {dimension_numbers = #tpu.dot_dimension_numbers<[1], [1], [0], [0], [0, 0, 1, 0], [], []>} : vector<64x64xbf16>, vector<64x64xbf16>, vector<64x64xf32> -> vector<64x64xf32>
    %cst_45 = arith.constant 0.204526439 : f32
    %73 = vector.broadcast %cst_45 : f32 to vector<64x64xf32>
    %74 = arith.mulf %72, %73 : vector<64x64xf32>
    %cst_46 = arith.constant dense<0xFF800000> : vector<64xf32>
    %75 = vector.multi_reduction <maximumf>, %74, %cst_46 [1] : vector<64x64xf32> to vector<64xf32>
    %76 = vector.shape_cast %75 : vector<64xf32> to vector<64x1xf32>
    %77 = vector.broadcast %76 : vector<64x1xf32> to vector<64x64xf32>
    %78 = arith.subf %74, %77 : vector<64x64xf32>
    %79 = math.exp %78 : vector<64x64xf32>
    %cst_47 = arith.constant dense<0.000000e+00> : vector<64xf32>
    %80 = vector.multi_reduction <add>, %79, %cst_47 [1] : vector<64x64xf32> to vector<64xf32>
    %81 = vector.shape_cast %80 : vector<64xf32> to vector<64x1xf32>
    %82 = tpu.reciprocal %81 {approx = true} : vector<64x1xf32> -> vector<64x1xf32>
    %cst_48 = arith.constant 5.000000e+00 : f32
    %83 = vector.broadcast %cst_48 : f32 to vector<64x1xf32>
    %84 = arith.mulf %82, %83 : vector<64x1xf32>
    %c-858993459_i32_49 = arith.constant -858993459 : i32
    %85 = vector.broadcast %c-858993459_i32_49 : i32 to vector<64x64xi32>
    %86 = arith.cmpi uge, %69, %85 : vector<64x64xi32>
    %cst_50 = arith.constant 0.000000e+00 : f32
    %87 = vector.broadcast %cst_50 : f32 to vector<64x64xf32>
    %88 = arith.select %86, %79, %87 : vector<64x64xi1>, vector<64x64xf32>
    %89 = arith.truncf %88 : vector<64x64xf32> to vector<64x64xbf16>
    %cst_51 = arith.constant dense<0.000000e+00> : vector<64x64xf32>
    %90 = tpu.matmul %89, %71, %cst_51 {dimension_numbers = #tpu.dot_dimension_numbers<[1], [0], [0], [1], [0, 0, 1, 1], [], []>} : vector<64x64xbf16>, vector<64x64xbf16>, vector<64x64xf32> -> vector<64x64xf32>
    %91 = vector.broadcast %84 : vector<64x1xf32> to vector<64x64xf32>
    %92 = arith.mulf %90, %91 : vector<64x64xf32>
    %c2_52 = arith.constant 2 : index
    %c0_53 = arith.constant 0 : index
    %c0_54 = arith.constant 0 : index
    %93 = vector.load %arg4[%c2_52, %c0_53, %c0_54] : memref<6x64x64xf32, #tpu.memory_space<vmem>>, vector<1x64x64xf32>
    %94 = vector.shape_cast %93 : vector<1x64x64xf32> to vector<64x64xf32>
    %95 = vector.shape_cast %92 : vector<64x64xf32> to vector<1x64x64xf32>
    tpu.vector_store %arg4[%c2_52, %c0_53, %c0_54], %95 {strides = array<i32>} : memref<6x64x64xf32, #tpu.memory_space<vmem>>, vector<1x64x64xf32>,
    %c3 = arith.constant 3 : index
    %c0_55 = arith.constant 0 : index
    %c0_56 = arith.constant 0 : index
    %96 = vector.load %arg1[%c3, %c0_55, %c0_56] : memref<6x64x64xf32, #tpu.memory_space<vmem>>, vector<1x64x64xf32>
    %97 = vector.shape_cast %96 : vector<1x64x64xf32> to vector<64x64xf32>
    %c3_57 = arith.constant 3 : index
    %c0_58 = arith.constant 0 : index
    %c0_59 = arith.constant 0 : index
    %98 = vector.load %arg2[%c3_57, %c0_58, %c0_59] : memref<6x64x64xf32, #tpu.memory_space<vmem>>, vector<1x64x64xf32>
    %99 = vector.shape_cast %98 : vector<1x64x64xf32> to vector<64x64xf32>
    %c3_60 = arith.constant 3 : index
    %c0_61 = arith.constant 0 : index
    %c0_62 = arith.constant 0 : index
    %100 = vector.load %arg3[%c3_60, %c0_61, %c0_62] : memref<6x64x64xi32, #tpu.memory_space<vmem>>, vector<1x64x64xi32>
    %101 = vector.shape_cast %100 : vector<1x64x64xi32> to vector<64x64xi32>
    %102 = arith.truncf %97 : vector<64x64xf32> to vector<64x64xbf16>
    %103 = arith.truncf %99 : vector<64x64xf32> to vector<64x64xbf16>
    %cst_63 = arith.constant dense<0.000000e+00> : vector<64x64xf32>
    %104 = tpu.matmul %102, %103, %cst_63 {dimension_numbers = #tpu.dot_dimension_numbers<[1], [1], [0], [0], [0, 0, 1, 0], [], []>} : vector<64x64xbf16>, vector<64x64xbf16>, vector<64x64xf32> -> vector<64x64xf32>
    %cst_64 = arith.constant 0.204526439 : f32
    %105 = vector.broadcast %cst_64 : f32 to vector<64x64xf32>
    %106 = arith.mulf %104, %105 : vector<64x64xf32>
    %cst_65 = arith.constant dense<0xFF800000> : vector<64xf32>
    %107 = vector.multi_reduction <maximumf>, %106, %cst_65 [1] : vector<64x64xf32> to vector<64xf32>
    %108 = vector.shape_cast %107 : vector<64xf32> to vector<64x1xf32>
    %109 = vector.broadcast %108 : vector<64x1xf32> to vector<64x64xf32>
    %110 = arith.subf %106, %109 : vector<64x64xf32>
    %111 = math.exp %110 : vector<64x64xf32>
    %cst_66 = arith.constant dense<0.000000e+00> : vector<64xf32>
    %112 = vector.multi_reduction <add>, %111, %cst_66 [1] : vector<64x64xf32> to vector<64xf32>
    %113 = vector.shape_cast %112 : vector<64xf32> to vector<64x1xf32>
    %114 = tpu.reciprocal %113 {approx = true} : vector<64x1xf32> -> vector<64x1xf32>
    %cst_67 = arith.constant 5.000000e+00 : f32
    %115 = vector.broadcast %cst_67 : f32 to vector<64x1xf32>
    %116 = arith.mulf %114, %115 : vector<64x1xf32>
    %c-858993459_i32_68 = arith.constant -858993459 : i32
    %117 = vector.broadcast %c-858993459_i32_68 : i32 to vector<64x64xi32>
    %118 = arith.cmpi uge, %101, %117 : vector<64x64xi32>
    %cst_69 = arith.constant 0.000000e+00 : f32
    %119 = vector.broadcast %cst_69 : f32 to vector<64x64xf32>
    %120 = arith.select %118, %111, %119 : vector<64x64xi1>, vector<64x64xf32>
    %121 = arith.truncf %120 : vector<64x64xf32> to vector<64x64xbf16>
    %cst_70 = arith.constant dense<0.000000e+00> : vector<64x64xf32>
    %122 = tpu.matmul %121, %103, %cst_70 {dimension_numbers = #tpu.dot_dimension_numbers<[1], [0], [0], [1], [0, 0, 1, 1], [], []>} : vector<64x64xbf16>, vector<64x64xbf16>, vector<64x64xf32> -> vector<64x64xf32>
    %123 = vector.broadcast %116 : vector<64x1xf32> to vector<64x64xf32>
    %124 = arith.mulf %122, %123 : vector<64x64xf32>
    %c3_71 = arith.constant 3 : index
    %c0_72 = arith.constant 0 : index
    %c0_73 = arith.constant 0 : index
    %125 = vector.load %arg4[%c3_71, %c0_72, %c0_73] : memref<6x64x64xf32, #tpu.memory_space<vmem>>, vector<1x64x64xf32>
    %126 = vector.shape_cast %125 : vector<1x64x64xf32> to vector<64x64xf32>
    %127 = vector.shape_cast %124 : vector<64x64xf32> to vector<1x64x64xf32>
    tpu.vector_store %arg4[%c3_71, %c0_72, %c0_73], %127 {strides = array<i32>} : memref<6x64x64xf32, #tpu.memory_space<vmem>>, vector<1x64x64xf32>,
    %c4 = arith.constant 4 : index
    %c0_74 = arith.constant 0 : index
    %c0_75 = arith.constant 0 : index
    %128 = vector.load %arg1[%c4, %c0_74, %c0_75] : memref<6x64x64xf32, #tpu.memory_space<vmem>>, vector<1x64x64xf32>
    %129 = vector.shape_cast %128 : vector<1x64x64xf32> to vector<64x64xf32>
    %c4_76 = arith.constant 4 : index
    %c0_77 = arith.constant 0 : index
    %c0_78 = arith.constant 0 : index
    %130 = vector.load %arg2[%c4_76, %c0_77, %c0_78] : memref<6x64x64xf32, #tpu.memory_space<vmem>>, vector<1x64x64xf32>
    %131 = vector.shape_cast %130 : vector<1x64x64xf32> to vector<64x64xf32>
    %c4_79 = arith.constant 4 : index
    %c0_80 = arith.constant 0 : index
    %c0_81 = arith.constant 0 : index
    %132 = vector.load %arg3[%c4_79, %c0_80, %c0_81] : memref<6x64x64xi32, #tpu.memory_space<vmem>>, vector<1x64x64xi32>
    %133 = vector.shape_cast %132 : vector<1x64x64xi32> to vector<64x64xi32>
    %134 = arith.truncf %129 : vector<64x64xf32> to vector<64x64xbf16>
    %135 = arith.truncf %131 : vector<64x64xf32> to vector<64x64xbf16>
    %cst_82 = arith.constant dense<0.000000e+00> : vector<64x64xf32>
    %136 = tpu.matmul %134, %135, %cst_82 {dimension_numbers = #tpu.dot_dimension_numbers<[1], [1], [0], [0], [0, 0, 1, 0], [], []>} : vector<64x64xbf16>, vector<64x64xbf16>, vector<64x64xf32> -> vector<64x64xf32>
    %cst_83 = arith.constant 0.204526439 : f32
    %137 = vector.broadcast %cst_83 : f32 to vector<64x64xf32>
    %138 = arith.mulf %136, %137 : vector<64x64xf32>
    %cst_84 = arith.constant dense<0xFF800000> : vector<64xf32>
    %139 = vector.multi_reduction <maximumf>, %138, %cst_84 [1] : vector<64x64xf32> to vector<64xf32>
    %140 = vector.shape_cast %139 : vector<64xf32> to vector<64x1xf32>
    %141 = vector.broadcast %140 : vector<64x1xf32> to vector<64x64xf32>
    %142 = arith.subf %138, %141 : vector<64x64xf32>
    %143 = math.exp %142 : vector<64x64xf32>
    %cst_85 = arith.constant dense<0.000000e+00> : vector<64xf32>
    %144 = vector.multi_reduction <add>, %143, %cst_85 [1] : vector<64x64xf32> to vector<64xf32>
    %145 = vector.shape_cast %144 : vector<64xf32> to vector<64x1xf32>
    %146 = tpu.reciprocal %145 {approx = true} : vector<64x1xf32> -> vector<64x1xf32>
    %cst_86 = arith.constant 5.000000e+00 : f32
    %147 = vector.broadcast %cst_86 : f32 to vector<64x1xf32>
    %148 = arith.mulf %146, %147 : vector<64x1xf32>
    %c-858993459_i32_87 = arith.constant -858993459 : i32
    %149 = vector.broadcast %c-858993459_i32_87 : i32 to vector<64x64xi32>
    %150 = arith.cmpi uge, %133, %149 : vector<64x64xi32>
    %cst_88 = arith.constant 0.000000e+00 : f32
    %151 = vector.broadcast %cst_88 : f32 to vector<64x64xf32>
    %152 = arith.select %150, %143, %151 : vector<64x64xi1>, vector<64x64xf32>
    %153 = arith.truncf %152 : vector<64x64xf32> to vector<64x64xbf16>
    %cst_89 = arith.constant dense<0.000000e+00> : vector<64x64xf32>
    %154 = tpu.matmul %153, %135, %cst_89 {dimension_numbers = #tpu.dot_dimension_numbers<[1], [0], [0], [1], [0, 0, 1, 1], [], []>} : vector<64x64xbf16>, vector<64x64xbf16>, vector<64x64xf32> -> vector<64x64xf32>
    %155 = vector.broadcast %148 : vector<64x1xf32> to vector<64x64xf32>
    %156 = arith.mulf %154, %155 : vector<64x64xf32>
    %c4_90 = arith.constant 4 : index
    %c0_91 = arith.constant 0 : index
    %c0_92 = arith.constant 0 : index
    %157 = vector.load %arg4[%c4_90, %c0_91, %c0_92] : memref<6x64x64xf32, #tpu.memory_space<vmem>>, vector<1x64x64xf32>
    %158 = vector.shape_cast %157 : vector<1x64x64xf32> to vector<64x64xf32>
    %159 = vector.shape_cast %156 : vector<64x64xf32> to vector<1x64x64xf32>
    tpu.vector_store %arg4[%c4_90, %c0_91, %c0_92], %159 {strides = array<i32>} : memref<6x64x64xf32, #tpu.memory_space<vmem>>, vector<1x64x64xf32>,
    %c5 = arith.constant 5 : index
    %c0_93 = arith.constant 0 : index
    %c0_94 = arith.constant 0 : index
    %160 = vector.load %arg1[%c5, %c0_93, %c0_94] : memref<6x64x64xf32, #tpu.memory_space<vmem>>, vector<1x64x64xf32>
    %161 = vector.shape_cast %160 : vector<1x64x64xf32> to vector<64x64xf32>
    %c5_95 = arith.constant 5 : index
    %c0_96 = arith.constant 0 : index
    %c0_97 = arith.constant 0 : index
    %162 = vector.load %arg2[%c5_95, %c0_96, %c0_97] : memref<6x64x64xf32, #tpu.memory_space<vmem>>, vector<1x64x64xf32>
    %163 = vector.shape_cast %162 : vector<1x64x64xf32> to vector<64x64xf32>
    %c5_98 = arith.constant 5 : index
    %c0_99 = arith.constant 0 : index
    %c0_100 = arith.constant 0 : index
    %164 = vector.load %arg3[%c5_98, %c0_99, %c0_100] : memref<6x64x64xi32, #tpu.memory_space<vmem>>, vector<1x64x64xi32>
    %165 = vector.shape_cast %164 : vector<1x64x64xi32> to vector<64x64xi32>
    %166 = arith.truncf %161 : vector<64x64xf32> to vector<64x64xbf16>
    %167 = arith.truncf %163 : vector<64x64xf32> to vector<64x64xbf16>
    %cst_101 = arith.constant dense<0.000000e+00> : vector<64x64xf32>
    %168 = tpu.matmul %166, %167, %cst_101 {dimension_numbers = #tpu.dot_dimension_numbers<[1], [1], [0], [0], [0, 0, 1, 0], [], []>} : vector<64x64xbf16>, vector<64x64xbf16>, vector<64x64xf32> -> vector<64x64xf32>
    %cst_102 = arith.constant 0.204526439 : f32
    %169 = vector.broadcast %cst_102 : f32 to vector<64x64xf32>
    %170 = arith.mulf %168, %169 : vector<64x64xf32>
    %cst_103 = arith.constant dense<0xFF800000> : vector<64xf32>
    %171 = vector.multi_reduction <maximumf>, %170, %cst_103 [1] : vector<64x64xf32> to vector<64xf32>
    %172 = vector.shape_cast %171 : vector<64xf32> to vector<64x1xf32>
    %173 = vector.broadcast %172 : vector<64x1xf32> to vector<64x64xf32>
    %174 = arith.subf %170, %173 : vector<64x64xf32>
    %175 = math.exp %174 : vector<64x64xf32>
    %cst_104 = arith.constant dense<0.000000e+00> : vector<64xf32>
    %176 = vector.multi_reduction <add>, %175, %cst_104 [1] : vector<64x64xf32> to vector<64xf32>
    %177 = vector.shape_cast %176 : vector<64xf32> to vector<64x1xf32>
    %178 = tpu.reciprocal %177 {approx = true} : vector<64x1xf32> -> vector<64x1xf32>
    %cst_105 = arith.constant 5.000000e+00 : f32
    %179 = vector.broadcast %cst_105 : f32 to vector<64x1xf32>
    %180 = arith.mulf %178, %179 : vector<64x1xf32>
    %c-858993459_i32_106 = arith.constant -858993459 : i32
    %181 = vector.broadcast %c-858993459_i32_106 : i32 to vector<64x64xi32>
    %182 = arith.cmpi uge, %165, %181 : vector<64x64xi32>
    %cst_107 = arith.constant 0.000000e+00 : f32
    %183 = vector.broadcast %cst_107 : f32 to vector<64x64xf32>
    %184 = arith.select %182, %175, %183 : vector<64x64xi1>, vector<64x64xf32>
    %185 = arith.truncf %184 : vector<64x64xf32> to vector<64x64xbf16>
    %cst_108 = arith.constant dense<0.000000e+00> : vector<64x64xf32>
    %186 = tpu.matmul %185, %167, %cst_108 {dimension_numbers = #tpu.dot_dimension_numbers<[1], [0], [0], [1], [0, 0, 1, 1], [], []>} : vector<64x64xbf16>, vector<64x64xbf16>, vector<64x64xf32> -> vector<64x64xf32>
    %187 = vector.broadcast %180 : vector<64x1xf32> to vector<64x64xf32>
    %188 = arith.mulf %186, %187 : vector<64x64xf32>
    %c5_109 = arith.constant 5 : index
    %c0_110 = arith.constant 0 : index
    %c0_111 = arith.constant 0 : index
    %189 = vector.load %arg4[%c5_109, %c0_110, %c0_111] : memref<6x64x64xf32, #tpu.memory_space<vmem>>, vector<1x64x64xf32>
    %190 = vector.shape_cast %189 : vector<1x64x64xf32> to vector<64x64xf32>
    %191 = vector.shape_cast %188 : vector<64x64xf32> to vector<1x64x64xf32>
    tpu.vector_store %arg4[%c5_109, %c0_110, %c0_111], %191 {strides = array<i32>} : memref<6x64x64xf32, #tpu.memory_space<vmem>>, vector<1x64x64xf32>,
    return
  }
  func.func @transform_0(%arg0: i32) -> (i32, i32, i32) {
    %c0_i32 = arith.constant 0 : i32
    %c0_i32_0 = arith.constant 0 : i32
    %c0_i32_1 = arith.constant 0 : i32
    return %arg0, %c0_i32, %c0_i32_0 : i32, i32, i32
  }
  func.func @transform_1(%arg0: i32) -> (i32, i32, i32) {
    %c0_i32 = arith.constant 0 : i32
    %c0_i32_0 = arith.constant 0 : i32
    %c0_i32_1 = arith.constant 0 : i32
    return %arg0, %c0_i32, %c0_i32_0 : i32, i32, i32
  }
  func.func @transform_2(%arg0: i32) -> (i32, i32, i32) {
    %c0_i32 = arith.constant 0 : i32
    %c0_i32_0 = arith.constant 0 : i32
    %c0_i32_1 = arith.constant 0 : i32
    return %arg0, %c0_i32, %c0_i32_0 : i32, i32, i32
  }
  func.func @transform_3(%arg0: i32) -> (i32, i32, i32) {
    %c0_i32 = arith.constant 0 : i32
    %c0_i32_0 = arith.constant 0 : i32
    %c0_i32_1 = arith.constant 0 : i32
    return %arg0, %c0_i32, %c0_i32_0 : i32, i32, i32
  }
}

</mosaic_0001>

<llo_original>
// kernel: tpu_custom_call.1
$region0: #{tpu_custom_call.1}
  #allocation0 [shape = 'u32[]', space=smem, size = 0x4, offset = 0x4, fixed_abs, tag = 'smem constant byte address 0x4 - core index']
  #allocation1 [shape = 'u32[72,128]{1,0:T(1,128)}', space=vmem, size = 0x9000, scoped, tag = 'internal scratch']
  %s0 = inlined_call_operand.hbm [shape: f32[6,64,64], index: 0, kind: input, shape index: {}]
  %s1 = inlined_call_operand.hbm [shape: f32[6,64,64], index: 1, kind: input, shape index: {}]
  %s2 = inlined_call_operand.hbm [shape: u32[6,64,64], index: 2, kind: input, shape index: {}]
  %s3 = inlined_call_operand.hbm [shape: f32[6,64,64], index: 3, kind: output, shape index: {}]
  %s4 = sld [smem:[#allocation0]]
  $region34: #{tpu_custom_call.1} parent=0
    _
  %s6 = ssub.s32 1, %s4
  %s7 = scalar_select 0, %s6, %s4
  $region1: #{tpu_custom_call.1} parent=0
    #allocation2 [shape = 'u8[196608]{0}', space=vmem, size = 0x30000, scoped, tag = 'input window, operand 0, single buffered']
    #allocation3 [shape = 's32[1]{0}', space=sflag, size = 0x4, scoped, tag = 'scoped memory for tpu_custom_call.1']
    #allocation4 [shape = 's32[1]{0}', space=sflag, size = 0x4, scoped, tag = 'scoped memory for tpu_custom_call.1']
    #allocation5 [shape = 'u8[196608]{0}', space=vmem, size = 0x30000, scoped, tag = 'input window, operand 1, single buffered']
    #allocation6 [shape = 's32[1]{0}', space=sflag, size = 0x4, scoped, tag = 'scoped memory for tpu_custom_call.1']
    #allocation7 [shape = 'u8[196608]{0}', space=vmem, size = 0x30000, scoped, tag = 'input window, operand 2, single buffered']
    #allocation8 [shape = 'u8[196608]{0}', space=vmem, size = 0x30000, scoped, tag = 'output window, operand 0, single buffered']
    %8 = vsyncpa [#allocation3], 0
    %9 = vsyncpa [#allocation6], 0
    %10 = vsyncpa [#allocation4], 0
    // Predicated region
    $region2: #{tpu_custom_call.1} parent=1 // pred_check
      _
    $region3: #{tpu_custom_call.1} parent=1 // pred_check_branch
      %12 = sbr.rel (0) target = $region5
    $region4: #{tpu_custom_call.1} parent=1 // pred_region
      %14 = vsyncadd [#allocation3], 0
      %s15 = sshll.u32 %s0, 4
      %s16 = int_to_ptr.hbm [resolvable:$true] %s15
      %s17 = sshll.u32 [#allocation2], 4
      %s18 = int_to_ptr.vmem [resolvable:$true] %s17
      %23 = dma.hbm_to_vmem [thread:$0]  %s16, 6144, %s18, [#allocation3], 128, 128, 8
    $region5: #{tpu_custom_call.1} parent=1 // pred_fallthru
      _
    // Predicated region
    $region6: #{tpu_custom_call.1} parent=1 // pred_check
      _
    $region7: #{tpu_custom_call.1} parent=1 // pred_check_branch
      %25 = sbr.rel (0) target = $region9
    $region8: #{tpu_custom_call.1} parent=1 // pred_region
      %27 = vsyncadd [#allocation6], 0
      %s28 = sshll.u32 %s1, 4
      %s29 = int_to_ptr.hbm [resolvable:$true] %s28
      %s30 = sshll.u32 [#allocation5], 4
      %s31 = int_to_ptr.vmem [resolvable:$true] %s30
      %36 = dma.hbm_to_vmem [thread:$0]  %s29, 6144, %s31, [#allocation6], 128, 128, 8
    $region9: #{tpu_custom_call.1} parent=1 // pred_fallthru
      _
    // Predicated region
    $region10: #{tpu_custom_call.1} parent=1 // pred_check
      _
    $region11: #{tpu_custom_call.1} parent=1 // pred_check_branch
      %38 = sbr.rel (0) target = $region13
    $region12: #{tpu_custom_call.1} parent=1 // pred_region
      %40 = vsyncadd [#allocation6], 0
      %s41 = sshll.u32 %s2, 4
      %s42 = int_to_ptr.hbm [resolvable:$true] %s41
      %s43 = sshll.u32 [#allocation7], 4
      %s44 = int_to_ptr.vmem [resolvable:$true] %s43
      %49 = dma.hbm_to_vmem [thread:$0]  %s42, 6144, %s44, [#allocation6], 128, 128, 8
    $region13: #{tpu_custom_call.1} parent=1 // pred_fallthru
      _
    // Predicated region
    $region14: #{tpu_custom_call.1} parent=1 // pred_check
      _
    $region15: #{tpu_custom_call.1} parent=1 // pred_check_branch
      %51 = sbr.rel (0) target = $region17
    $region16: #{tpu_custom_call.1} parent=1 // pred_region
      %53 = dma.done [#allocation3], 6144
    $region17: #{tpu_custom_call.1} parent=1 // pred_fallthru
      _
    // Predicated region
    $region18: #{tpu_custom_call.1} parent=1 // pred_check
      _
    $region19: #{tpu_custom_call.1} parent=1 // pred_check_branch
      %55 = sbr.rel (0) target = $region21
    $region20: #{tpu_custom_call.1} parent=1 // pred_region
      %57 = dma.done [#allocation6], 6144
    $region21: #{tpu_custom_call.1} parent=1 // pred_fallthru
      _
    // Predicated region
    $region22: #{tpu_custom_call.1} parent=1 // pred_check
      _
    $region23: #{tpu_custom_call.1} parent=1 // pred_check_branch
      %59 = sbr.rel (0) target = $region25
    $region24: #{tpu_custom_call.1} parent=1 // pred_region
      %61 = dma.done [#allocation6], 6144
    $region25: #{tpu_custom_call.1} parent=1 // pred_fallthru
      _
    %v63 = vld [vmem:[#allocation2] sm:$0xff]
    %v64 = vld [vmem:[#allocation2 + $0x8] sm:$0xff]
    %v65 = vld [vmem:[#allocation2 + $0x10] sm:$0xff]
    %v66 = vld [vmem:[#allocation2 + $0x18] sm:$0xff]
    %v67 = vld [vmem:[#allocation2 + $0x20] sm:$0xff]
    %v68 = vld [vmem:[#allocation2 + $0x28] sm:$0xff]
    %v69 = vld [vmem:[#allocation2 + $0x30] sm:$0xff]
    %v70 = vld [vmem:[#allocation2 + $0x38] sm:$0xff]
    %v71 = vld [vmem:[#allocation5] sm:$0xff]
    %v72 = vld [vmem:[#allocation5 + $0x8] sm:$0xff]
    %v73 = vld [vmem:[#allocation5 + $0x10] sm:$0xff]
    %v74 = vld [vmem:[#allocation5 + $0x18] sm:$0xff]
    %v75 = vld [vmem:[#allocation5 + $0x20] sm:$0xff]
    %v76 = vld [vmem:[#allocation5 + $0x28] sm:$0xff]
    %v77 = vld [vmem:[#allocation5 + $0x30] sm:$0xff]
    %v78 = vld [vmem:[#allocation5 + $0x38] sm:$0xff]
    %v79 = vld [vmem:[#allocation7] sm:$0xff]
    %v80 = vld [vmem:[#allocation7 + $0x8] sm:$0xff]
    %v81 = vld [vmem:[#allocation7 + $0x10] sm:$0xff]
    %v82 = vld [vmem:[#allocation7 + $0x18] sm:$0xff]
    %v83 = vld [vmem:[#allocation7 + $0x20] sm:$0xff]
    %v84 = vld [vmem:[#allocation7 + $0x28] sm:$0xff]
    %v85 = vld [vmem:[#allocation7 + $0x30] sm:$0xff]
    %v86 = vld [vmem:[#allocation7 + $0x38] sm:$0xff]
    %v87 = vpack.c.bf16 %v64, %v63
    %v88 = vpack.c.bf16 %v66, %v65
    %v89 = vpack.c.bf16 %v68, %v67
    %v90 = vpack.c.bf16 %v70, %v69
    %v91 = vpack.c.bf16 %v72, %v71
    %v92 = vpack.c.bf16 %v74, %v73
    %v93 = vpack.c.bf16 %v76, %v75
    %v94 = vpack.c.bf16 %v78, %v77
    %vm95 = vcmask 523264
    %v97 = vsel %vm95, %v87, 0
    %v100 = vsel %vm95, %v88, 0
    %v103 = vsel %vm95, %v89, 0
    %v106 = vsel %vm95, %v90, 0
    %v109 = vsel %vm95, %v91, 0
    %v112 = vsel %vm95, %v92, 0
    %v115 = vsel %vm95, %v93, 0
    %v118 = vsel %vm95, %v94, 0
    %120 = vmatpush.bf16.xpose.msra.mxu0 0
    %121 = vmatpush.bf16.xpose.msra.mxu0 0
    %122 = vmatpush.bf16.xpose.msra.mxu0 0
    %123 = vmatpush.bf16.xpose.msra.mxu0 0
    %124 = vmatpush.bf16.xpose.msra.mxu0 %v118
    %125 = vmatpush.bf16.xpose.msra.mxu0 %v115
    %126 = vmatpush.bf16.xpose.msra.mxu0 %v112
    %127 = vmatpush.bf16.xpose.msra.mxu0 %v109
    %128 = vmatmul.bf16.gmra.mxu0 %v97
    %v129 = vpop.f32.mrf.mxu0
    %v130 = vadd.f32 0.0, %v129
    %v131 = vpop.f32.mrf.mxu0
    %v132 = vadd.f32 0.0, %v131
    %133 = vmatmul.bf16.gmra.mxu0 %v100
    %v134 = vpop.f32.mrf.mxu0
    %v135 = vadd.f32 0.0, %v134
    %v136 = vpop.f32.mrf.mxu0
    %v137 = vadd.f32 0.0, %v136
    %138 = vmatmul.bf16.gmra.mxu0 %v103
    %v139 = vpop.f32.mrf.mxu0
    %v140 = vadd.f32 0.0, %v139
    %v141 = vpop.f32.mrf.mxu0
    %v142 = vadd.f32 0.0, %v141
    %143 = vmatmul.bf16.gmra.mxu0 %v106
    %v144 = vpop.f32.mrf.mxu0
    %v145 = vadd.f32 0.0, %v144
    %v146 = vpop.f32.mrf.mxu0
    %v147 = vadd.f32 0.0, %v146
    %148 = vdwg.mxu0
    %v149 = vmul.f32 %v130, 0.20452644
    %v150 = vmul.f32 %v132, 0.20452644
    %v151 = vmul.f32 %v135, 0.20452644
    %v152 = vmul.f32 %v137, 0.20452644
    %v153 = vmul.f32 %v140, 0.20452644
    %v154 = vmul.f32 %v142, 0.20452644
    %v155 = vmul.f32 %v145, 0.20452644
    %v156 = vmul.f32 %v147, 0.20452644
    %v157 = vsel %vm95, %v149, -inf
    %158 = vmax.xlane.f32.xlu0 %v157
    %v159 = vpop.xlane.xlu0 %158
    %v160 = vsel %vm95, %v150, -inf
    %161 = vmax.xlane.f32.xlu0 %v160
    %v162 = vpop.xlane.xlu0 %161
    %v163 = vsel %vm95, %v151, -inf
    %164 = vmax.xlane.f32.xlu0 %v163
    %v165 = vpop.xlane.xlu0 %164
    %v166 = vsel %vm95, %v152, -inf
    %167 = vmax.xlane.f32.xlu0 %v166
    %v168 = vpop.xlane.xlu0 %167
    %v169 = vsel %vm95, %v153, -inf
    %170 = vmax.xlane.f32.xlu0 %v169
    %v171 = vpop.xlane.xlu0 %170
    %v172 = vsel %vm95, %v154, -inf
    %173 = vmax.xlane.f32.xlu0 %v172
    %v174 = vpop.xlane.xlu0 %173
    %v175 = vsel %vm95, %v155, -inf
    %176 = vmax.xlane.f32.xlu0 %v175
    %v177 = vpop.xlane.xlu0 %176
    %v178 = vsel %vm95, %v156, -inf
    %179 = vmax.xlane.f32.xlu0 %v178
    %v180 = vpop.xlane.xlu0 %179
    %v181 = vsub.f32 %v149, %v159
    %v182 = vsub.f32 %v150, %v162
    %v183 = vsub.f32 %v151, %v165
    %v184 = vsub.f32 %v152, %v168
    %v185 = vsub.f32 %v153, %v171
    %v186 = vsub.f32 %v154, %v174
    %v187 = vsub.f32 %v155, %v177
    %v188 = vsub.f32 %v156, %v180
    %v189 = vmul.f32 %v181, 1.442695
    %v190 = vpow.pop %v189
    %v191 = vmul.f32 %v182, 1.442695
    %v192 = vpow.pop %v191
    %v193 = vmul.f32 %v183, 1.442695
    %v194 = vpow.pop %v193
    %v195 = vmul.f32 %v184, 1.442695
    %v196 = vpow.pop %v195
    %v197 = vmul.f32 %v185, 1.442695
    %v198 = vpow.pop %v197
    %v199 = vmul.f32 %v186, 1.442695
    %v200 = vpow.pop %v199
    %v201 = vmul.f32 %v187, 1.442695
    %v202 = vpow.pop %v201
    %v203 = vmul.f32 %v188, 1.442695
    %v204 = vpow.pop %v203
    %v205 = vsel %vm95, %v190, 0.0
    %206 = vadd.xlane.f32.xlu0 %v205
    %v207 = vpop.xlane.xlu0 %206
    %v208 = vsel %vm95, %v192, 0.0
    %209 = vadd.xlane.f32.xlu0 %v208
    %v210 = vpop.xlane.xlu0 %209
    %v211 = vsel %vm95, %v194, 0.0
    %212 = vadd.xlane.f32.xlu0 %v211
    %v213 = vpop.xlane.xlu0 %212
    %v214 = vsel %vm95, %v196, 0.0
    %215 = vadd.xlane.f32.xlu0 %v214
    %v216 = vpop.xlane.xlu0 %215
    %v217 = vsel %vm95, %v198, 0.0
    %218 = vadd.xlane.f32.xlu0 %v217
    %v219 = vpop.xlane.xlu0 %218
    %v220 = vsel %vm95, %v200, 0.0
    %221 = vadd.xlane.f32.xlu0 %v220
    %v222 = vpop.xlane.xlu0 %221
    %v223 = vsel %vm95, %v202, 0.0
    %224 = vadd.xlane.f32.xlu0 %v223
    %v225 = vpop.xlane.xlu0 %224
    %v226 = vsel %vm95, %v204, 0.0
    %227 = vadd.xlane.f32.xlu0 %v226
    %v228 = vpop.xlane.xlu0 %227
    %v229 = vrcp.pop %v207
    %v230 = vrcp.pop %v210
    %v231 = vrcp.pop %v213
    %v232 = vrcp.pop %v216
    %v233 = vrcp.pop %v219
    %v234 = vrcp.pop %v222
    %v235 = vrcp.pop %v225
    %v236 = vrcp.pop %v228
    %v237 = vmul.f32 %v229, 5.0
    %v238 = vmul.f32 %v230, 5.0
    %v239 = vmul.f32 %v231, 5.0
    %v240 = vmul.f32 %v232, 5.0
    %v241 = vmul.f32 %v233, 5.0
    %v242 = vmul.f32 %v234, 5.0
    %v243 = vmul.f32 %v235, 5.0
    %v244 = vmul.f32 %v236, 5.0
    %v245 = vadd.s32 %v79, 2147483648
    %vm247 = vcmp.ge.s32.totalorder %v245, 1288490189
    %v248 = vadd.s32 %v80, 2147483648
    %vm250 = vcmp.ge.s32.totalorder %v248, 1288490189
    %v251 = vadd.s32 %v81, 2147483648
    %vm253 = vcmp.ge.s32.totalorder %v251, 1288490189
    %v254 = vadd.s32 %v82, 2147483648
    %vm256 = vcmp.ge.s32.totalorder %v254, 1288490189
    %v257 = vadd.s32 %v83, 2147483648
    %vm259 = vcmp.ge.s32.totalorder %v257, 1288490189
    %v260 = vadd.s32 %v84, 2147483648
    %vm262 = vcmp.ge.s32.totalorder %v260, 1288490189
    %v263 = vadd.s32 %v85, 2147483648
    %vm265 = vcmp.ge.s32.totalorder %v263, 1288490189
    %v266 = vadd.s32 %v86, 2147483648
    %vm268 = vcmp.ge.s32.totalorder %v266, 1288490189
    %v269 = vsel %vm247, %v190, 0.0
    %v270 = vsel %vm250, %v192, 0.0
    %v271 = vsel %vm253, %v194, 0.0
    %v272 = vsel %vm256, %v196, 0.0
    %v273 = vsel %vm259, %v198, 0.0
    %v274 = vsel %vm262, %v200, 0.0
    %v275 = vsel %vm265, %v202, 0.0
    %v276 = vsel %vm268, %v204, 0.0
    %v277 = vpack.c.bf16 %v270, %v269
    %v278 = vpack.c.bf16 %v272, %v271
    %v279 = vpack.c.bf16 %v274, %v273
    %v280 = vpack.c.bf16 %v276, %v275
    %v282 = vsel %vm95, %v277, 0
    %v285 = vsel %vm95, %v278, 0
    %v288 = vsel %vm95, %v279, 0
    %v291 = vsel %vm95, %v280, 0
    %293 = vmatpush.bf16.msra.mxu0 0
    %294 = vmatpush.bf16.msra.mxu0 0
    %295 = vmatpush.bf16.msra.mxu0 0
    %296 = vmatpush.bf16.msra.mxu0 0
    %297 = vmatpush.bf16.msra.mxu0 %v94
    %298 = vmatpush.bf16.msra.mxu0 %v93
    %299 = vmatpush.bf16.msra.mxu0 %v92
    %300 = vmatpush.bf16.msra.mxu0 %v91
    %301 = vmatmul.bf16.gmra.mxu0 %v282
    %v302 = vpop.f32.mrf.mxu0
    %v303 = vadd.f32 0.0, %v302
    %v304 = vpop.f32.mrf.mxu0
    %v305 = vadd.f32 0.0, %v304
    %306 = vmatmul.bf16.gmra.mxu0 %v285
    %v307 = vpop.f32.mrf.mxu0
    %v308 = vadd.f32 0.0, %v307
    %v309 = vpop.f32.mrf.mxu0
    %v310 = vadd.f32 0.0, %v309
    %311 = vmatmul.bf16.gmra.mxu0 %v288
    %v312 = vpop.f32.mrf.mxu0
    %v313 = vadd.f32 0.0, %v312
    %v314 = vpop.f32.mrf.mxu0
    %v315 = vadd.f32 0.0, %v314
    %316 = vmatmul.bf16.gmra.mxu0 %v291
    %v317 = vpop.f32.mrf.mxu0
    %v318 = vadd.f32 0.0, %v317
    %v319 = vpop.f32.mrf.mxu0
    %v320 = vadd.f32 0.0, %v319
    %321 = vdwg.mxu0
    %v322 = vmul.f32 %v303, %v237
    %v323 = vmul.f32 %v305, %v238
    %v324 = vmul.f32 %v308, %v239
    %v325 = vmul.f32 %v310, %v240
    %v326 = vmul.f32 %v313, %v241
    %v327 = vmul.f32 %v315, %v242
    %v328 = vmul.f32 %v318, %v243
    %v329 = vmul.f32 %v320, %v244
    %330 = vst.msk [vmem:[#allocation8] sm:$0xff] %vm95, %v322
    %331 = vst.msk [vmem:[#allocation8 + $0x8] sm:$0xff] %vm95, %v323
    %332 = vst.msk [vmem:[#allocation8 + $0x10] sm:$0xff] %vm95, %v324
    %333 = vst.msk [vmem:[#allocation8 + $0x18] sm:$0xff] %vm95, %v325
    %334 = vst.msk [vmem:[#allocation8 + $0x20] sm:$0xff] %vm95, %v326
    %335 = vst.msk [vmem:[#allocation8 + $0x28] sm:$0xff] %vm95, %v327
    %336 = vst.msk [vmem:[#allocation8 + $0x30] sm:$0xff] %vm95, %v328
    %337 = vst.msk [vmem:[#allocation8 + $0x38] sm:$0xff] %vm95, %v329
    %s338 = scalar_lea.vmem [#allocation2], 64
    %v339 = vld [vmem:[%s338] sm:$0xff]
    %v340 = vld [vmem:[%s338 + $0x8] sm:$0xff]
    %v341 = vld [vmem:[%s338 + $0x10] sm:$0xff]
    %v342 = vld [vmem:[%s338 + $0x18] sm:$0xff]
    %v343 = vld [vmem:[%s338 + $0x20] sm:$0xff]
    %v344 = vld [vmem:[%s338 + $0x28] sm:$0xff]
    %v345 = vld [vmem:[%s338 + $0x30] sm:$0xff]
    %v346 = vld [vmem:[%s338 + $0x38] sm:$0xff]
    %s347 = scalar_lea.vmem [#allocation5], 64
    %v348 = vld [vmem:[%s347] sm:$0xff]
    %v349 = vld [vmem:[%s347 + $0x8] sm:$0xff]
    %v350 = vld [vmem:[%s347 + $0x10] sm:$0xff]
    %v351 = vld [vmem:[%s347 + $0x18] sm:$0xff]
    %v352 = vld [vmem:[%s347 + $0x20] sm:$0xff]
    %v353 = vld [vmem:[%s347 + $0x28] sm:$0xff]
    %v354 = vld [vmem:[%s347 + $0x30] sm:$0xff]
    %v355 = vld [vmem:[%s347 + $0x38] sm:$0xff]
    %s356 = scalar_lea.vmem [#allocation7], 64
    %v357 = vld [vmem:[%s356] sm:$0xff]
    %v358 = vld [vmem:[%s356 + $0x8] sm:$0xff]
    %v359 = vld [vmem:[%s356 + $0x10] sm:$0xff]
    %v360 = vld [vmem:[%s356 + $0x18] sm:$0xff]
    %v361 = vld [vmem:[%s356 + $0x20] sm:$0xff]
    %v362 = vld [vmem:[%s356 + $0x28] sm:$0xff]
    %v363 = vld [vmem:[%s356 + $0x30] sm:$0xff]
    %v364 = vld [vmem:[%s356 + $0x38] sm:$0xff]
    %v365 = vpack.c.bf16 %v340, %v339
    %v366 = vpack.c.bf16 %v342, %v341
    %v367 = vpack.c.bf16 %v344, %v343
    %v368 = vpack.c.bf16 %v346, %v345
    %v369 = vpack.c.bf16 %v349, %v348
    %v370 = vpack.c.bf16 %v351, %v350
    %v371 = vpack.c.bf16 %v353, %v352
    %v372 = vpack.c.bf16 %v355, %v354
    %v374 = vsel %vm95, %v365, 0
    %v377 = vsel %vm95, %v366, 0
    %v380 = vsel %vm95, %v367, 0
    %v383 = vsel %vm95, %v368, 0
    %v386 = vsel %vm95, %v369, 0
    %v389 = vsel %vm95, %v370, 0
    %v392 = vsel %vm95, %v371, 0
    %v395 = vsel %vm95, %v372, 0
    %397 = vmatpush.bf16.xpose.msra.mxu0 0
    %398 = vmatpush.bf16.xpose.msra.mxu0 0
    %399 = vmatpush.bf16.xpose.msra.mxu0 0
    %400 = vmatpush.bf16.xpose.msra.mxu0 0
    %401 = vmatpush.bf16.xpose.msra.mxu0 %v395
    %402 = vmatpush.bf16.xpose.msra.mxu0 %v392
    %403 = vmatpush.bf16.xpose.msra.mxu0 %v389
    %404 = vmatpush.bf16.xpose.msra.mxu0 %v386
    %405 = vmatmul.bf16.gmra.mxu0 %v374
    %v406 = vpop.f32.mrf.mxu0
    %v407 = vadd.f32 0.0, %v406
    %v408 = vpop.f32.mrf.mxu0
    %v409 = vadd.f32 0.0, %v408
    %410 = vmatmul.bf16.gmra.mxu0 %v377
    %v411 = vpop.f32.mrf.mxu0
    %v412 = vadd.f32 0.0, %v411
    %v413 = vpop.f32.mrf.mxu0
    %v414 = vadd.f32 0.0, %v413
    %415 = vmatmul.bf16.gmra.mxu0 %v380
    %v416 = vpop.f32.mrf.mxu0
    %v417 = vadd.f32 0.0, %v416
    %v418 = vpop.f32.mrf.mxu0
    %v419 = vadd.f32 0.0, %v418
    %420 = vmatmul.bf16.gmra.mxu0 %v383
    %v421 = vpop.f32.mrf.mxu0
    %v422 = vadd.f32 0.0, %v421
    %v423 = vpop.f32.mrf.mxu0
    %v424 = vadd.f32 0.0, %v423
    %425 = vdwg.mxu0
    %v426 = vmul.f32 %v407, 0.20452644
    %v427 = vmul.f32 %v409, 0.20452644
    %v428 = vmul.f32 %v412, 0.20452644
    %v429 = vmul.f32 %v414, 0.20452644
    %v430 = vmul.f32 %v417, 0.20452644
    %v431 = vmul.f32 %v419, 0.20452644
    %v432 = vmul.f32 %v422, 0.20452644
    %v433 = vmul.f32 %v424, 0.20452644
    %v434 = vsel %vm95, %v426, -inf
    %435 = vmax.xlane.f32.xlu0 %v434
    %v436 = vpop.xlane.xlu0 %435
    %v437 = vsel %vm95, %v427, -inf
    %438 = vmax.xlane.f32.xlu0 %v437
    %v439 = vpop.xlane.xlu0 %438
    %v440 = vsel %vm95, %v428, -inf
    %441 = vmax.xlane.f32.xlu0 %v440
    %v442 = vpop.xlane.xlu0 %441
    %v443 = vsel %vm95, %v429, -inf
    %444 = vmax.xlane.f32.xlu0 %v443
    %v445 = vpop.xlane.xlu0 %444
    %v446 = vsel %vm95, %v430, -inf
    %447 = vmax.xlane.f32.xlu0 %v446
    %v448 = vpop.xlane.xlu0 %447
    %v449 = vsel %vm95, %v431, -inf
    %450 = vmax.xlane.f32.xlu0 %v449
    %v451 = vpop.xlane.xlu0 %450
    %v452 = vsel %vm95, %v432, -inf
    %453 = vmax.xlane.f32.xlu0 %v452
    %v454 = vpop.xlane.xlu0 %453
    %v455 = vsel %vm95, %v433, -inf
    %456 = vmax.xlane.f32.xlu0 %v455
    %v457 = vpop.xlane.xlu0 %456
    %v458 = vsub.f32 %v426, %v436
    %v459 = vsub.f32 %v427, %v439
    %v460 = vsub.f32 %v428, %v442
    %v461 = vsub.f32 %v429, %v445
    %v462 = vsub.f32 %v430, %v448
    %v463 = vsub.f32 %v431, %v451
    %v464 = vsub.f32 %v432, %v454
    %v465 = vsub.f32 %v433, %v457
    %v466 = vmul.f32 %v458, 1.442695
    %v467 = vpow.pop %v466
    %v468 = vmul.f32 %v459, 1.442695
    %v469 = vpow.pop %v468
    %v470 = vmul.f32 %v460, 1.442695
    %v471 = vpow.pop %v470
    %v472 = vmul.f32 %v461, 1.442695
    %v473 = vpow.pop %v472
    %v474 = vmul.f32 %v462, 1.442695
    %v475 = vpow.pop %v474
    %v476 = vmul.f32 %v463, 1.442695
    %v477 = vpow.pop %v476
    %v478 = vmul.f32 %v464, 1.442695
    %v479 = vpow.pop %v478
    %v480 = vmul.f32 %v465, 1.442695
    %v481 = vpow.pop %v480
    %v482 = vsel %vm95, %v467, 0.0
    %483 = vadd.xlane.f32.xlu0 %v482
    %v484 = vpop.xlane.xlu0 %483
    %v485 = vsel %vm95, %v469, 0.0
    %486 = vadd.xlane.f32.xlu0 %v485
    %v487 = vpop.xlane.xlu0 %486
    %v488 = vsel %vm95, %v471, 0.0
    %489 = vadd.xlane.f32.xlu0 %v488
    %v490 = vpop.xlane.xlu0 %489
    %v491 = vsel %vm95, %v473, 0.0
    %492 = vadd.xlane.f32.xlu0 %v491
    %v493 = vpop.xlane.xlu0 %492
    %v494 = vsel %vm95, %v475, 0.0
    %495 = vadd.xlane.f32.xlu0 %v494
    %v496 = vpop.xlane.xlu0 %495
    %v497 = vsel %vm95, %v477, 0.0
    %498 = vadd.xlane.f32.xlu0 %v497
    %v499 = vpop.xlane.xlu0 %498
    %v500 = vsel %vm95, %v479, 0.0
    %501 = vadd.xlane.f32.xlu0 %v500
    %v502 = vpop.xlane.xlu0 %501
    %v503 = vsel %vm95, %v481, 0.0
    %504 = vadd.xlane.f32.xlu0 %v503
    %v505 = vpop.xlane.xlu0 %504
    %v506 = vrcp.pop %v484
    %v507 = vrcp.pop %v487
    %v508 = vrcp.pop %v490
    %v509 = vrcp.pop %v493
    %v510 = vrcp.pop %v496
    %v511 = vrcp.pop %v499
    %v512 = vrcp.pop %v502
    %v513 = vrcp.pop %v505
    %v514 = vmul.f32 %v506, 5.0
    %v515 = vmul.f32 %v507, 5.0
    %v516 = vmul.f32 %v508, 5.0
    %v517 = vmul.f32 %v509, 5.0
    %v518 = vmul.f32 %v510, 5.0
    %v519 = vmul.f32 %v511, 5.0
    %v520 = vmul.f32 %v512, 5.0
    %v521 = vmul.f32 %v513, 5.0
    %v522 = vadd.s32 %v357, 2147483648
    %vm524 = vcmp.ge.s32.totalorder %v522, 1288490189
    %v525 = vadd.s32 %v358, 2147483648
    %vm527 = vcmp.ge.s32.totalorder %v525, 1288490189
    %v528 = vadd.s32 %v359, 2147483648
    %vm530 = vcmp.ge.s32.totalorder %v528, 1288490189
    %v531 = vadd.s32 %v360, 2147483648
    %vm533 = vcmp.ge.s32.totalorder %v531, 1288490189
    %v534 = vadd.s32 %v361, 2147483648
    %vm536 = vcmp.ge.s32.totalorder %v534, 1288490189
    %v537 = vadd.s32 %v362, 2147483648
    %vm539 = vcmp.ge.s32.totalorder %v537, 1288490189
    %v540 = vadd.s32 %v363, 2147483648
    %vm542 = vcmp.ge.s32.totalorder %v540, 1288490189
    %v543 = vadd.s32 %v364, 2147483648
    %vm545 = vcmp.ge.s32.totalorder %v543, 1288490189
    %v546 = vsel %vm524, %v467, 0.0
    %v547 = vsel %vm527, %v469, 0.0
    %v548 = vsel %vm530, %v471, 0.0
    %v549 = vsel %vm533, %v473, 0.0
    %v550 = vsel %vm536, %v475, 0.0
    %v551 = vsel %vm539, %v477, 0.0
    %v552 = vsel %vm542, %v479, 0.0
    %v553 = vsel %vm545, %v481, 0.0
    %v554 = vpack.c.bf16 %v547, %v546
    %v555 = vpack.c.bf16 %v549, %v548
    %v556 = vpack.c.bf16 %v551, %v550
    %v557 = vpack.c.bf16 %v553, %v552
    %v559 = vsel %vm95, %v554, 0
    %v562 = vsel %vm95, %v555, 0
    %v565 = vsel %vm95, %v556, 0
    %v568 = vsel %vm95, %v557, 0
    %570 = vmatpush.bf16.msra.mxu0 0
    %571 = vmatpush.bf16.msra.mxu0 0
    %572 = vmatpush.bf16.msra.mxu0 0
    %573 = vmatpush.bf16.msra.mxu0 0
    %574 = vmatpush.bf16.msra.mxu0 %v372
    %575 = vmatpush.bf16.msra.mxu0 %v371
    %576 = vmatpush.bf16.msra.mxu0 %v370
    %577 = vmatpush.bf16.msra.mxu0 %v369
    %578 = vmatmul.bf16.gmra.mxu0 %v559
    %v579 = vpop.f32.mrf.mxu0
    %v580 = vadd.f32 0.0, %v579
    %v581 = vpop.f32.mrf.mxu0
    %v582 = vadd.f32 0.0, %v581
    %583 = vmatmul.bf16.gmra.mxu0 %v562
    %v584 = vpop.f32.mrf.mxu0
    %v585 = vadd.f32 0.0, %v584
    %v586 = vpop.f32.mrf.mxu0
    %v587 = vadd.f32 0.0, %v586
    %588 = vmatmul.bf16.gmra.mxu0 %v565
    %v589 = vpop.f32.mrf.mxu0
    %v590 = vadd.f32 0.0, %v589
    %v591 = vpop.f32.mrf.mxu0
    %v592 = vadd.f32 0.0, %v591
    %593 = vmatmul.bf16.gmra.mxu0 %v568
    %v594 = vpop.f32.mrf.mxu0
    %v595 = vadd.f32 0.0, %v594
    %v596 = vpop.f32.mrf.mxu0
    %v597 = vadd.f32 0.0, %v596
    %598 = vdwg.mxu0
    %v599 = vmul.f32 %v580, %v514
    %v600 = vmul.f32 %v582, %v515
    %v601 = vmul.f32 %v585, %v516
    %v602 = vmul.f32 %v587, %v517
    %v603 = vmul.f32 %v590, %v518
    %v604 = vmul.f32 %v592, %v519
    %v605 = vmul.f32 %v595, %v520
    %v606 = vmul.f32 %v597, %v521
    %s607 = scalar_lea.vmem [#allocation8], 64
    %608 = vst.msk [vmem:[%s607] sm:$0xff] %vm95, %v599
    %609 = vst.msk [vmem:[%s607 + $0x8] sm:$0xff] %vm95, %v600
    %610 = vst.msk [vmem:[%s607 + $0x10] sm:$0xff] %vm95, %v601
    %611 = vst.msk [vmem:[%s607 + $0x18] sm:$0xff] %vm95, %v602
    %612 = vst.msk [vmem:[%s607 + $0x20] sm:$0xff] %vm95, %v603
    %613 = vst.msk [vmem:[%s607 + $0x28] sm:$0xff] %vm95, %v604
    %614 = vst.msk [vmem:[%s607 + $0x30] sm:$0xff] %vm95, %v605
    %615 = vst.msk [vmem:[%s607 + $0x38] sm:$0xff] %vm95, %v606
    %s616 = scalar_lea.vmem [#allocation2], 128
    %v617 = vld [vmem:[%s616] sm:$0xff]
    %v618 = vld [vmem:[%s616 + $0x8] sm:$0xff]
    %v619 = vld [vmem:[%s616 + $0x10] sm:$0xff]
    %v620 = vld [vmem:[%s616 + $0x18] sm:$0xff]
    %v621 = vld [vmem:[%s616 + $0x20] sm:$0xff]
    %v622 = vld [vmem:[%s616 + $0x28] sm:$0xff]
    %v623 = vld [vmem:[%s616 + $0x30] sm:$0xff]
    %v624 = vld [vmem:[%s616 + $0x38] sm:$0xff]
    %s625 = scalar_lea.vmem [#allocation5], 128
    %v626 = vld [vmem:[%s625] sm:$0xff]
    %v627 = vld [vmem:[%s625 + $0x8] sm:$0xff]
    %v628 = vld [vmem:[%s625 + $0x10] sm:$0xff]
    %v629 = vld [vmem:[%s625 + $0x18] sm:$0xff]
    %v630 = vld [vmem:[%s625 + $0x20] sm:$0xff]
    %v631 = vld [vmem:[%s625 + $0x28] sm:$0xff]
    %v632 = vld [vmem:[%s625 + $0x30] sm:$0xff]
    %v633 = vld [vmem:[%s625 + $0x38] sm:$0xff]
    %s634 = scalar_lea.vmem [#allocation7], 128
    %v635 = vld [vmem:[%s634] sm:$0xff]
    %v636 = vld [vmem:[%s634 + $0x8] sm:$0xff]
    %v637 = vld [vmem:[%s634 + $0x10] sm:$0xff]
    %v638 = vld [vmem:[%s634 + $0x18] sm:$0xff]
    %v639 = vld [vmem:[%s634 + $0x20] sm:$0xff]
    %v640 = vld [vmem:[%s634 + $0x28] sm:$0xff]
    %v641 = vld [vmem:[%s634 + $0x30] sm:$0xff]
    %v642 = vld [vmem:[%s634 + $0x38] sm:$0xff]
    %v643 = vpack.c.bf16 %v618, %v617
    %v644 = vpack.c.bf16 %v620, %v619
    %v645 = vpack.c.bf16 %v622, %v621
    %v646 = vpack.c.bf16 %v624, %v623
    %v647 = vpack.c.bf16 %v627, %v626
    %v648 = vpack.c.bf16 %v629, %v628
    %v649 = vpack.c.bf16 %v631, %v630
    %v650 = vpack.c.bf16 %v633, %v632
    %v652 = vsel %vm95, %v643, 0
    %v655 = vsel %vm95, %v644, 0
    %v658 = vsel %vm95, %v645, 0
    %v661 = vsel %vm95, %v646, 0
    %v664 = vsel %vm95, %v647, 0
    %v667 = vsel %vm95, %v648, 0
    %v670 = vsel %vm95, %v649, 0
    %v673 = vsel %vm95, %v650, 0
    %675 = vmatpush.bf16.xpose.msra.mxu0 0
    %676 = vmatpush.bf16.xpose.msra.mxu0 0
    %677 = vmatpush.bf16.xpose.msra.mxu0 0
    %678 = vmatpush.bf16.xpose.msra.mxu0 0
    %679 = vmatpush.bf16.xpose.msra.mxu0 %v673
    %680 = vmatpush.bf16.xpose.msra.mxu0 %v670
    %681 = vmatpush.bf16.xpose.msra.mxu0 %v667
    %682 = vmatpush.bf16.xpose.msra.mxu0 %v664
    %683 = vmatmul.bf16.gmra.mxu0 %v652
    %v684 = vpop.f32.mrf.mxu0
    %v685 = vadd.f32 0.0, %v684
    %v686 = vpop.f32.mrf.mxu0
    %v687 = vadd.f32 0.0, %v686
    %688 = vmatmul.bf16.gmra.mxu0 %v655
    %v689 = vpop.f32.mrf.mxu0
    %v690 = vadd.f32 0.0, %v689
    %v691 = vpop.f32.mrf.mxu0
    %v692 = vadd.f32 0.0, %v691
    %693 = vmatmul.bf16.gmra.mxu0 %v658
    %v694 = vpop.f32.mrf.mxu0
    %v695 = vadd.f32 0.0, %v694
    %v696 = vpop.f32.mrf.mxu0
    %v697 = vadd.f32 0.0, %v696
    %698 = vmatmul.bf16.gmra.mxu0 %v661
    %v699 = vpop.f32.mrf.mxu0
    %v700 = vadd.f32 0.0, %v699
    %v701 = vpop.f32.mrf.mxu0
    %v702 = vadd.f32 0.0, %v701
    %703 = vdwg.mxu0
    %v704 = vmul.f32 %v685, 0.20452644
    %v705 = vmul.f32 %v687, 0.20452644
    %v706 = vmul.f32 %v690, 0.20452644
    %v707 = vmul.f32 %v692, 0.20452644
    %v708 = vmul.f32 %v695, 0.20452644
    %v709 = vmul.f32 %v697, 0.20452644
    %v710 = vmul.f32 %v700, 0.20452644
    %v711 = vmul.f32 %v702, 0.20452644
    %v712 = vsel %vm95, %v704, -inf
    %713 = vmax.xlane.f32.xlu0 %v712
    %v714 = vpop.xlane.xlu0 %713
    %v715 = vsel %vm95, %v705, -inf
    %716 = vmax.xlane.f32.xlu0 %v715
    %v717 = vpop.xlane.xlu0 %716
    %v718 = vsel %vm95, %v706, -inf
    %719 = vmax.xlane.f32.xlu0 %v718
    %v720 = vpop.xlane.xlu0 %719
    %v721 = vsel %vm95, %v707, -inf
    %722 = vmax.xlane.f32.xlu0 %v721
    %v723 = vpop.xlane.xlu0 %722
    %v724 = vsel %vm95, %v708, -inf
    %725 = vmax.xlane.f32.xlu0 %v724
    %v726 = vpop.xlane.xlu0 %725
    %v727 = vsel %vm95, %v709, -inf
    %728 = vmax.xlane.f32.xlu0 %v727
    %v729 = vpop.xlane.xlu0 %728
    %v730 = vsel %vm95, %v710, -inf
    %731 = vmax.xlane.f32.xlu0 %v730
    %v732 = vpop.xlane.xlu0 %731
    %v733 = vsel %vm95, %v711, -inf
    %734 = vmax.xlane.f32.xlu0 %v733
    %v735 = vpop.xlane.xlu0 %734
    %v736 = vsub.f32 %v704, %v714
    %v737 = vsub.f32 %v705, %v717
    %v738 = vsub.f32 %v706, %v720
    %v739 = vsub.f32 %v707, %v723
    %v740 = vsub.f32 %v708, %v726
    %v741 = vsub.f32 %v709, %v729
    %v742 = vsub.f32 %v710, %v732
    %v743 = vsub.f32 %v711, %v735
    %v744 = vmul.f32 %v736, 1.442695
    %v745 = vpow.pop %v744
    %v746 = vmul.f32 %v737, 1.442695
    %v747 = vpow.pop %v746
    %v748 = vmul.f32 %v738, 1.442695
    %v749 = vpow.pop %v748
    %v750 = vmul.f32 %v739, 1.442695
    %v751 = vpow.pop %v750
    %v752 = vmul.f32 %v740, 1.442695
    %v753 = vpow.pop %v752
    %v754 = vmul.f32 %v741, 1.442695
    %v755 = vpow.pop %v754
    %v756 = vmul.f32 %v742, 1.442695
    %v757 = vpow.pop %v756
    %v758 = vmul.f32 %v743, 1.442695
    %v759 = vpow.pop %v758
    %v760 = vsel %vm95, %v745, 0.0
    %761 = vadd.xlane.f32.xlu0 %v760
    %v762 = vpop.xlane.xlu0 %761
    %v763 = vsel %vm95, %v747, 0.0
    %764 = vadd.xlane.f32.xlu0 %v763
    %v765 = vpop.xlane.xlu0 %764
    %v766 = vsel %vm95, %v749, 0.0
    %767 = vadd.xlane.f32.xlu0 %v766
    %v768 = vpop.xlane.xlu0 %767
    %v769 = vsel %vm95, %v751, 0.0
    %770 = vadd.xlane.f32.xlu0 %v769
    %v771 = vpop.xlane.xlu0 %770
    %v772 = vsel %vm95, %v753, 0.0
    %773 = vadd.xlane.f32.xlu0 %v772
    %v774 = vpop.xlane.xlu0 %773
    %v775 = vsel %vm95, %v755, 0.0
    %776 = vadd.xlane.f32.xlu0 %v775
    %v777 = vpop.xlane.xlu0 %776
    %v778 = vsel %vm95, %v757, 0.0
    %779 = vadd.xlane.f32.xlu0 %v778
    %v780 = vpop.xlane.xlu0 %779
    %v781 = vsel %vm95, %v759, 0.0
    %782 = vadd.xlane.f32.xlu0 %v781
    %v783 = vpop.xlane.xlu0 %782
    %v784 = vrcp.pop %v762
    %v785 = vrcp.pop %v765
    %v786 = vrcp.pop %v768
    %v787 = vrcp.pop %v771
    %v788 = vrcp.pop %v774
    %v789 = vrcp.pop %v777
    %v790 = vrcp.pop %v780
    %v791 = vrcp.pop %v783
    %v792 = vmul.f32 %v784, 5.0
    %v793 = vmul.f32 %v785, 5.0
    %v794 = vmul.f32 %v786, 5.0
    %v795 = vmul.f32 %v787, 5.0
    %v796 = vmul.f32 %v788, 5.0
    %v797 = vmul.f32 %v789, 5.0
    %v798 = vmul.f32 %v790, 5.0
    %v799 = vmul.f32 %v791, 5.0
    %v800 = vadd.s32 %v635, 2147483648
    %vm802 = vcmp.ge.s32.totalorder %v800, 1288490189
    %v803 = vadd.s32 %v636, 2147483648
    %vm805 = vcmp.ge.s32.totalorder %v803, 1288490189
    %v806 = vadd.s32 %v637, 2147483648
    %vm808 = vcmp.ge.s32.totalorder %v806, 1288490189
    %v809 = vadd.s32 %v638, 2147483648
    %vm811 = vcmp.ge.s32.totalorder %v809, 1288490189
    %v812 = vadd.s32 %v639, 2147483648
    %vm814 = vcmp.ge.s32.totalorder %v812, 1288490189
    %v815 = vadd.s32 %v640, 2147483648
    %vm817 = vcmp.ge.s32.totalorder %v815, 1288490189
    %v818 = vadd.s32 %v641, 2147483648
    %vm820 = vcmp.ge.s32.totalorder %v818, 1288490189
    %v821 = vadd.s32 %v642, 2147483648
    %vm823 = vcmp.ge.s32.totalorder %v821, 1288490189
    %v824 = vsel %vm802, %v745, 0.0
    %v825 = vsel %vm805, %v747, 0.0
    %v826 = vsel %vm808, %v749, 0.0
    %v827 = vsel %vm811, %v751, 0.0
    %v828 = vsel %vm814, %v753, 0.0
    %v829 = vsel %vm817, %v755, 0.0
    %v830 = vsel %vm820, %v757, 0.0
    %v831 = vsel %vm823, %v759, 0.0
    %v832 = vpack.c.bf16 %v825, %v824
    %v833 = vpack.c.bf16 %v827, %v826
    %v834 = vpack.c.bf16 %v829, %v828
    %v835 = vpack.c.bf16 %v831, %v830
    %v837 = vsel %vm95, %v832, 0
    %v840 = vsel %vm95, %v833, 0
    %v843 = vsel %vm95, %v834, 0
    %v846 = vsel %vm95, %v835, 0
    %848 = vmatpush.bf16.msra.mxu0 0
    %849 = vmatpush.bf16.msra.mxu0 0
    %850 = vmatpush.bf16.msra.mxu0 0
    %851 = vmatpush.bf16.msra.mxu0 0
    %852 = vmatpush.bf16.msra.mxu0 %v650
    %853 = vmatpush.bf16.msra.mxu0 %v649
    %854 = vmatpush.bf16.msra.mxu0 %v648
    %855 = vmatpush.bf16.msra.mxu0 %v647
    %856 = vmatmul.bf16.gmra.mxu0 %v837
    %v857 = vpop.f32.mrf.mxu0
    %v858 = vadd.f32 0.0, %v857
    %v859 = vpop.f32.mrf.mxu0
    %v860 = vadd.f32 0.0, %v859
    %861 = vmatmul.bf16.gmra.mxu0 %v840
    %v862 = vpop.f32.mrf.mxu0
    %v863 = vadd.f32 0.0, %v862
    %v864 = vpop.f32.mrf.mxu0
    %v865 = vadd.f32 0.0, %v864
    %866 = vmatmul.bf16.gmra.mxu0 %v843
    %v867 = vpop.f32.mrf.mxu0
    %v868 = vadd.f32 0.0, %v867
    %v869 = vpop.f32.mrf.mxu0
    %v870 = vadd.f32 0.0, %v869
    %871 = vmatmul.bf16.gmra.mxu0 %v846
    %v872 = vpop.f32.mrf.mxu0
    %v873 = vadd.f32 0.0, %v872
    %v874 = vpop.f32.mrf.mxu0
    %v875 = vadd.f32 0.0, %v874
    %876 = vdwg.mxu0
    %v877 = vmul.f32 %v858, %v792
    %v878 = vmul.f32 %v860, %v793
    %v879 = vmul.f32 %v863, %v794
    %v880 = vmul.f32 %v865, %v795
    %v881 = vmul.f32 %v868, %v796
    %v882 = vmul.f32 %v870, %v797
    %v883 = vmul.f32 %v873, %v798
    %v884 = vmul.f32 %v875, %v799
    %s885 = scalar_lea.vmem [#allocation8], 128
    %886 = vst.msk [vmem:[%s885] sm:$0xff] %vm95, %v877
    %887 = vst.msk [vmem:[%s885 + $0x8] sm:$0xff] %vm95, %v878
    %888 = vst.msk [vmem:[%s885 + $0x10] sm:$0xff] %vm95, %v879
    %889 = vst.msk [vmem:[%s885 + $0x18] sm:$0xff] %vm95, %v880
    %890 = vst.msk [vmem:[%s885 + $0x20] sm:$0xff] %vm95, %v881
    %891 = vst.msk [vmem:[%s885 + $0x28] sm:$0xff] %vm95, %v882
    %892 = vst.msk [vmem:[%s885 + $0x30] sm:$0xff] %vm95, %v883
    %893 = vst.msk [vmem:[%s885 + $0x38] sm:$0xff] %vm95, %v884
    %s894 = scalar_lea.vmem [#allocation2], 192
    %v895 = vld [vmem:[%s894] sm:$0xff]
    %v896 = vld [vmem:[%s894 + $0x8] sm:$0xff]
    %v897 = vld [vmem:[%s894 + $0x10] sm:$0xff]
    %v898 = vld [vmem:[%s894 + $0x18] sm:$0xff]
    %v899 = vld [vmem:[%s894 + $0x20] sm:$0xff]
    %v900 = vld [vmem:[%s894 + $0x28] sm:$0xff]
    %v901 = vld [vmem:[%s894 + $0x30] sm:$0xff]
    %v902 = vld [vmem:[%s894 + $0x38] sm:$0xff]
    %s903 = scalar_lea.vmem [#allocation5], 192
    %v904 = vld [vmem:[%s903] sm:$0xff]
    %v905 = vld [vmem:[%s903 + $0x8] sm:$0xff]
    %v906 = vld [vmem:[%s903 + $0x10] sm:$0xff]
    %v907 = vld [vmem:[%s903 + $0x18] sm:$0xff]
    %v908 = vld [vmem:[%s903 + $0x20] sm:$0xff]
    %v909 = vld [vmem:[%s903 + $0x28] sm:$0xff]
    %v910 = vld [vmem:[%s903 + $0x30] sm:$0xff]
    %v911 = vld [vmem:[%s903 + $0x38] sm:$0xff]
    %s912 = scalar_lea.vmem [#allocation7], 192
    %v913 = vld [vmem:[%s912] sm:$0xff]
    %v914 = vld [vmem:[%s912 + $0x8] sm:$0xff]
    %v915 = vld [vmem:[%s912 + $0x10] sm:$0xff]
    %v916 = vld [vmem:[%s912 + $0x18] sm:$0xff]
    %v917 = vld [vmem:[%s912 + $0x20] sm:$0xff]
    %v918 = vld [vmem:[%s912 + $0x28] sm:$0xff]
    %v919 = vld [vmem:[%s912 + $0x30] sm:$0xff]
    %v920 = vld [vmem:[%s912 + $0x38] sm:$0xff]
    %v921 = vpack.c.bf16 %v896, %v895
    %v922 = vpack.c.bf16 %v898, %v897
    %v923 = vpack.c.bf16 %v900, %v899
    %v924 = vpack.c.bf16 %v902, %v901
    %v925 = vpack.c.bf16 %v905, %v904
    %v926 = vpack.c.bf16 %v907, %v906
    %v927 = vpack.c.bf16 %v909, %v908
    %v928 = vpack.c.bf16 %v911, %v910
    %v930 = vsel %vm95, %v921, 0
    %v933 = vsel %vm95, %v922, 0
    %v936 = vsel %vm95, %v923, 0
    %v939 = vsel %vm95, %v924, 0
    %v942 = vsel %vm95, %v925, 0
    %v945 = vsel %vm95, %v926, 0
    %v948 = vsel %vm95, %v927, 0
    %v951 = vsel %vm95, %v928, 0
    %953 = vmatpush.bf16.xpose.msra.mxu0 0
    %954 = vmatpush.bf16.xpose.msra.mxu0 0
    %955 = vmatpush.bf16.xpose.msra.mxu0 0
    %956 = vmatpush.bf16.xpose.msra.mxu0 0
    %957 = vmatpush.bf16.xpose.msra.mxu0 %v951
    %958 = vmatpush.bf16.xpose.msra.mxu0 %v948
    %959 = vmatpush.bf16.xpose.msra.mxu0 %v945
    %960 = vmatpush.bf16.xpose.msra.mxu0 %v942
    %961 = vmatmul.bf16.gmra.mxu0 %v930
    %v962 = vpop.f32.mrf.mxu0
    %v963 = vadd.f32 0.0, %v962
    %v964 = vpop.f32.mrf.mxu0
    %v965 = vadd.f32 0.0, %v964
    %966 = vmatmul.bf16.gmra.mxu0 %v933
    %v967 = vpop.f32.mrf.mxu0
    %v968 = vadd.f32 0.0, %v967
    %v969 = vpop.f32.mrf.mxu0
    %v970 = vadd.f32 0.0, %v969
    %971 = vmatmul.bf16.gmra.mxu0 %v936
    %v972 = vpop.f32.mrf.mxu0
    %v973 = vadd.f32 0.0, %v972
    %v974 = vpop.f32.mrf.mxu0
    %v975 = vadd.f32 0.0, %v974
    %976 = vmatmul.bf16.gmra.mxu0 %v939
    %v977 = vpop.f32.mrf.mxu0
    %v978 = vadd.f32 0.0, %v977
    %v979 = vpop.f32.mrf.mxu0
    %v980 = vadd.f32 0.0, %v979
    %981 = vdwg.mxu0
    %v982 = vmul.f32 %v963, 0.20452644
    %v983 = vmul.f32 %v965, 0.20452644
    %v984 = vmul.f32 %v968, 0.20452644
    %v985 = vmul.f32 %v970, 0.20452644
    %v986 = vmul.f32 %v973, 0.20452644
    %v987 = vmul.f32 %v975, 0.20452644
    %v988 = vmul.f32 %v978, 0.20452644
    %v989 = vmul.f32 %v980, 0.20452644
    %v990 = vsel %vm95, %v982, -inf
    %991 = vmax.xlane.f32.xlu0 %v990
    %v992 = vpop.xlane.xlu0 %991
    %v993 = vsel %vm95, %v983, -inf
    %994 = vmax.xlane.f32.xlu0 %v993
    %v995 = vpop.xlane.xlu0 %994
    %v996 = vsel %vm95, %v984, -inf
    %997 = vmax.xlane.f32.xlu0 %v996
    %v998 = vpop.xlane.xlu0 %997
    %v999 = vsel %vm95, %v985, -inf
    %1000 = vmax.xlane.f32.xlu0 %v999
    %v1001 = vpop.xlane.xlu0 %1000
    %v1002 = vsel %vm95, %v986, -inf
    %1003 = vmax.xlane.f32.xlu0 %v1002
    %v1004 = vpop.xlane.xlu0 %1003
    %v1005 = vsel %vm95, %v987, -inf
    %1006 = vmax.xlane.f32.xlu0 %v1005
    %v1007 = vpop.xlane.xlu0 %1006
    %v1008 = vsel %vm95, %v988, -inf
    %1009 = vmax.xlane.f32.xlu0 %v1008
    %v1010 = vpop.xlane.xlu0 %1009
    %v1011 = vsel %vm95, %v989, -inf
    %1012 = vmax.xlane.f32.xlu0 %v1011
    %v1013 = vpop.xlane.xlu0 %1012
    %v1014 = vsub.f32 %v982, %v992
    %v1015 = vsub.f32 %v983, %v995
    %v1016 = vsub.f32 %v984, %v998
    %v1017 = vsub.f32 %v985, %v1001
    %v1018 = vsub.f32 %v986, %v1004
    %v1019 = vsub.f32 %v987, %v1007
    %v1020 = vsub.f32 %v988, %v1010
    %v1021 = vsub.f32 %v989, %v1013
    %v1022 = vmul.f32 %v1014, 1.442695
    %v1023 = vpow.pop %v1022
    %v1024 = vmul.f32 %v1015, 1.442695
    %v1025 = vpow.pop %v1024
    %v1026 = vmul.f32 %v1016, 1.442695
    %v1027 = vpow.pop %v1026
    %v1028 = vmul.f32 %v1017, 1.442695
    %v1029 = vpow.pop %v1028
    %v1030 = vmul.f32 %v1018, 1.442695
    %v1031 = vpow.pop %v1030
    %v1032 = vmul.f32 %v1019, 1.442695
    %v1033 = vpow.pop %v1032
    %v1034 = vmul.f32 %v1020, 1.442695
    %v1035 = vpow.pop %v1034
    %v1036 = vmul.f32 %v1021, 1.442695
    %v1037 = vpow.pop %v1036
    %v1038 = vsel %vm95, %v1023, 0.0
    %1039 = vadd.xlane.f32.xlu0 %v1038
    %v1040 = vpop.xlane.xlu0 %1039
    %v1041 = vsel %vm95, %v1025, 0.0
    %1042 = vadd.xlane.f32.xlu0 %v1041
    %v1043 = vpop.xlane.xlu0 %1042
    %v1044 = vsel %vm95, %v1027, 0.0
    %1045 = vadd.xlane.f32.xlu0 %v1044
    %v1046 = vpop.xlane.xlu0 %1045
    %v1047 = vsel %vm95, %v1029, 0.0
    %1048 = vadd.xlane.f32.xlu0 %v1047
    %v1049 = vpop.xlane.xlu0 %1048
    %v1050 = vsel %vm95, %v1031, 0.0
    %1051 = vadd.xlane.f32.xlu0 %v1050
    %v1052 = vpop.xlane.xlu0 %1051
    %v1053 = vsel %vm95, %v1033, 0.0
    %1054 = vadd.xlane.f32.xlu0 %v1053
    %v1055 = vpop.xlane.xlu0 %1054
    %v1056 = vsel %vm95, %v1035, 0.0
    %1057 = vadd.xlane.f32.xlu0 %v1056
    %v1058 = vpop.xlane.xlu0 %1057
    %v1059 = vsel %vm95, %v1037, 0.0
    %1060 = vadd.xlane.f32.xlu0 %v1059
    %v1061 = vpop.xlane.xlu0 %1060
    %v1062 = vrcp.pop %v1040
    %v1063 = vrcp.pop %v1043
    %v1064 = vrcp.pop %v1046
    %v1065 = vrcp.pop %v1049
    %v1066 = vrcp.pop %v1052
    %v1067 = vrcp.pop %v1055
    %v1068 = vrcp.pop %v1058
    %v1069 = vrcp.pop %v1061
    %v1070 = vmul.f32 %v1062, 5.0
    %v1071 = vmul.f32 %v1063, 5.0
    %v1072 = vmul.f32 %v1064, 5.0
    %v1073 = vmul.f32 %v1065, 5.0
    %v1074 = vmul.f32 %v1066, 5.0
    %v1075 = vmul.f32 %v1067, 5.0
    %v1076 = vmul.f32 %v1068, 5.0
    %v1077 = vmul.f32 %v1069, 5.0
    %v1078 = vadd.s32 %v913, 2147483648
    %vm1080 = vcmp.ge.s32.totalorder %v1078, 1288490189
    %v1081 = vadd.s32 %v914, 2147483648
    %vm1083 = vcmp.ge.s32.totalorder %v1081, 1288490189
    %v1084 = vadd.s32 %v915, 2147483648
    %vm1086 = vcmp.ge.s32.totalorder %v1084, 1288490189
    %v1087 = vadd.s32 %v916, 2147483648
    %vm1089 = vcmp.ge.s32.totalorder %v1087, 1288490189
    %v1090 = vadd.s32 %v917, 2147483648
    %vm1092 = vcmp.ge.s32.totalorder %v1090, 1288490189
    %v1093 = vadd.s32 %v918, 2147483648
    %vm1095 = vcmp.ge.s32.totalorder %v1093, 1288490189
    %v1096 = vadd.s32 %v919, 2147483648
    %vm1098 = vcmp.ge.s32.totalorder %v1096, 1288490189
    %v1099 = vadd.s32 %v920, 2147483648
    %vm1101 = vcmp.ge.s32.totalorder %v1099, 1288490189
    %v1102 = vsel %vm1080, %v1023, 0.0
    %v1103 = vsel %vm1083, %v1025, 0.0
    %v1104 = vsel %vm1086, %v1027, 0.0
    %v1105 = vsel %vm1089, %v1029, 0.0
    %v1106 = vsel %vm1092, %v1031, 0.0
    %v1107 = vsel %vm1095, %v1033, 0.0
    %v1108 = vsel %vm1098, %v1035, 0.0
    %v1109 = vsel %vm1101, %v1037, 0.0
    %v1110 = vpack.c.bf16 %v1103, %v1102
    %v1111 = vpack.c.bf16 %v1105, %v1104
    %v1112 = vpack.c.bf16 %v1107, %v1106
    %v1113 = vpack.c.bf16 %v1109, %v1108
    %v1115 = vsel %vm95, %v1110, 0
    %v1118 = vsel %vm95, %v1111, 0
    %v1121 = vsel %vm95, %v1112, 0
    %v1124 = vsel %vm95, %v1113, 0
    %1126 = vmatpush.bf16.msra.mxu0 0
    %1127 = vmatpush.bf16.msra.mxu0 0
    %1128 = vmatpush.bf16.msra.mxu0 0
    %1129 = vmatpush.bf16.msra.mxu0 0
    %1130 = vmatpush.bf16.msra.mxu0 %v928
    %1131 = vmatpush.bf16.msra.mxu0 %v927
    %1132 = vmatpush.bf16.msra.mxu0 %v926
    %1133 = vmatpush.bf16.msra.mxu0 %v925
    %1134 = vmatmul.bf16.gmra.mxu0 %v1115
    %v1135 = vpop.f32.mrf.mxu0
    %v1136 = vadd.f32 0.0, %v1135
    %v1137 = vpop.f32.mrf.mxu0
    %v1138 = vadd.f32 0.0, %v1137
    %1139 = vmatmul.bf16.gmra.mxu0 %v1118
    %v1140 = vpop.f32.mrf.mxu0
    %v1141 = vadd.f32 0.0, %v1140
    %v1142 = vpop.f32.mrf.mxu0
    %v1143 = vadd.f32 0.0, %v1142
    %1144 = vmatmul.bf16.gmra.mxu0 %v1121
    %v1145 = vpop.f32.mrf.mxu0
    %v1146 = vadd.f32 0.0, %v1145
    %v1147 = vpop.f32.mrf.mxu0
    %v1148 = vadd.f32 0.0, %v1147
    %1149 = vmatmul.bf16.gmra.mxu0 %v1124
    %v1150 = vpop.f32.mrf.mxu0
    %v1151 = vadd.f32 0.0, %v1150
    %v1152 = vpop.f32.mrf.mxu0
    %v1153 = vadd.f32 0.0, %v1152
    %1154 = vdwg.mxu0
    %v1155 = vmul.f32 %v1136, %v1070
    %v1156 = vmul.f32 %v1138, %v1071
    %v1157 = vmul.f32 %v1141, %v1072
    %v1158 = vmul.f32 %v1143, %v1073
    %v1159 = vmul.f32 %v1146, %v1074
    %v1160 = vmul.f32 %v1148, %v1075
    %v1161 = vmul.f32 %v1151, %v1076
    %v1162 = vmul.f32 %v1153, %v1077
    %s1163 = scalar_lea.vmem [#allocation8], 192
    %1164 = vst.msk [vmem:[%s1163] sm:$0xff] %vm95, %v1155
    %1165 = vst.msk [vmem:[%s1163 + $0x8] sm:$0xff] %vm95, %v1156
    %1166 = vst.msk [vmem:[%s1163 + $0x10] sm:$0xff] %vm95, %v1157
    %1167 = vst.msk [vmem:[%s1163 + $0x18] sm:$0xff] %vm95, %v1158
    %1168 = vst.msk [vmem:[%s1163 + $0x20] sm:$0xff] %vm95, %v1159
    %1169 = vst.msk [vmem:[%s1163 + $0x28] sm:$0xff] %vm95, %v1160
    %1170 = vst.msk [vmem:[%s1163 + $0x30] sm:$0xff] %vm95, %v1161
    %1171 = vst.msk [vmem:[%s1163 + $0x38] sm:$0xff] %vm95, %v1162
    %s1172 = scalar_lea.vmem [#allocation2], 256
    %v1173 = vld [vmem:[%s1172] sm:$0xff]
    %v1174 = vld [vmem:[%s1172 + $0x8] sm:$0xff]
    %v1175 = vld [vmem:[%s1172 + $0x10] sm:$0xff]
    %v1176 = vld [vmem:[%s1172 + $0x18] sm:$0xff]
    %v1177 = vld [vmem:[%s1172 + $0x20] sm:$0xff]
    %v1178 = vld [vmem:[%s1172 + $0x28] sm:$0xff]
    %v1179 = vld [vmem:[%s1172 + $0x30] sm:$0xff]
    %v1180 = vld [vmem:[%s1172 + $0x38] sm:$0xff]
    %s1181 = scalar_lea.vmem [#allocation5], 256
    %v1182 = vld [vmem:[%s1181] sm:$0xff]
    %v1183 = vld [vmem:[%s1181 + $0x8] sm:$0xff]
    %v1184 = vld [vmem:[%s1181 + $0x10] sm:$0xff]
    %v1185 = vld [vmem:[%s1181 + $0x18] sm:$0xff]
    %v1186 = vld [vmem:[%s1181 + $0x20] sm:$0xff]
    %v1187 = vld [vmem:[%s1181 + $0x28] sm:$0xff]
    %v1188 = vld [vmem:[%s1181 + $0x30] sm:$0xff]
    %v1189 = vld [vmem:[%s1181 + $0x38] sm:$0xff]
    %s1190 = scalar_lea.vmem [#allocation7], 256
    %v1191 = vld [vmem:[%s1190] sm:$0xff]
    %v1192 = vld [vmem:[%s1190 + $0x8] sm:$0xff]
    %v1193 = vld [vmem:[%s1190 + $0x10] sm:$0xff]
    %v1194 = vld [vmem:[%s1190 + $0x18] sm:$0xff]
    %v1195 = vld [vmem:[%s1190 + $0x20] sm:$0xff]
    %v1196 = vld [vmem:[%s1190 + $0x28] sm:$0xff]
    %v1197 = vld [vmem:[%s1190 + $0x30] sm:$0xff]
    %v1198 = vld [vmem:[%s1190 + $0x38] sm:$0xff]
    %v1199 = vpack.c.bf16 %v1174, %v1173
    %v1200 = vpack.c.bf16 %v1176, %v1175
    %v1201 = vpack.c.bf16 %v1178, %v1177
    %v1202 = vpack.c.bf16 %v1180, %v1179
    %v1203 = vpack.c.bf16 %v1183, %v1182
    %v1204 = vpack.c.bf16 %v1185, %v1184
    %v1205 = vpack.c.bf16 %v1187, %v1186
    %v1206 = vpack.c.bf16 %v1189, %v1188
    %v1208 = vsel %vm95, %v1199, 0
    %v1211 = vsel %vm95, %v1200, 0
    %v1214 = vsel %vm95, %v1201, 0
    %v1217 = vsel %vm95, %v1202, 0
    %v1220 = vsel %vm95, %v1203, 0
    %v1223 = vsel %vm95, %v1204, 0
    %v1226 = vsel %vm95, %v1205, 0
    %v1229 = vsel %vm95, %v1206, 0
    %1231 = vmatpush.bf16.xpose.msra.mxu0 0
    %1232 = vmatpush.bf16.xpose.msra.mxu0 0
    %1233 = vmatpush.bf16.xpose.msra.mxu0 0
    %1234 = vmatpush.bf16.xpose.msra.mxu0 0
    %1235 = vmatpush.bf16.xpose.msra.mxu0 %v1229
    %1236 = vmatpush.bf16.xpose.msra.mxu0 %v1226
    %1237 = vmatpush.bf16.xpose.msra.mxu0 %v1223
    %1238 = vmatpush.bf16.xpose.msra.mxu0 %v1220
    %1239 = vmatmul.bf16.gmra.mxu0 %v1208
    %v1240 = vpop.f32.mrf.mxu0
    %v1241 = vadd.f32 0.0, %v1240
    %v1242 = vpop.f32.mrf.mxu0
    %v1243 = vadd.f32 0.0, %v1242
    %1244 = vmatmul.bf16.gmra.mxu0 %v1211
    %v1245 = vpop.f32.mrf.mxu0
    %v1246 = vadd.f32 0.0, %v1245
    %v1247 = vpop.f32.mrf.mxu0
    %v1248 = vadd.f32 0.0, %v1247
    %1249 = vmatmul.bf16.gmra.mxu0 %v1214
    %v1250 = vpop.f32.mrf.mxu0
    %v1251 = vadd.f32 0.0, %v1250
    %v1252 = vpop.f32.mrf.mxu0
    %v1253 = vadd.f32 0.0, %v1252
    %1254 = vmatmul.bf16.gmra.mxu0 %v1217
    %v1255 = vpop.f32.mrf.mxu0
    %v1256 = vadd.f32 0.0, %v1255
    %v1257 = vpop.f32.mrf.mxu0
    %v1258 = vadd.f32 0.0, %v1257
    %1259 = vdwg.mxu0
    %v1260 = vmul.f32 %v1241, 0.20452644
    %v1261 = vmul.f32 %v1243, 0.20452644
    %v1262 = vmul.f32 %v1246, 0.20452644
    %v1263 = vmul.f32 %v1248, 0.20452644
    %v1264 = vmul.f32 %v1251, 0.20452644
    %v1265 = vmul.f32 %v1253, 0.20452644
    %v1266 = vmul.f32 %v1256, 0.20452644
    %v1267 = vmul.f32 %v1258, 0.20452644
    %v1268 = vsel %vm95, %v1260, -inf
    %1269 = vmax.xlane.f32.xlu0 %v1268
    %v1270 = vpop.xlane.xlu0 %1269
    %v1271 = vsel %vm95, %v1261, -inf
    %1272 = vmax.xlane.f32.xlu0 %v1271
    %v1273 = vpop.xlane.xlu0 %1272
    %v1274 = vsel %vm95, %v1262, -inf
    %1275 = vmax.xlane.f32.xlu0 %v1274
    %v1276 = vpop.xlane.xlu0 %1275
    %v1277 = vsel %vm95, %v1263, -inf
    %1278 = vmax.xlane.f32.xlu0 %v1277
    %v1279 = vpop.xlane.xlu0 %1278
    %v1280 = vsel %vm95, %v1264, -inf
    %1281 = vmax.xlane.f32.xlu0 %v1280
    %v1282 = vpop.xlane.xlu0 %1281
    %v1283 = vsel %vm95, %v1265, -inf
    %1284 = vmax.xlane.f32.xlu0 %v1283
    %v1285 = vpop.xlane.xlu0 %1284
    %v1286 = vsel %vm95, %v1266, -inf
    %1287 = vmax.xlane.f32.xlu0 %v1286
    %v1288 = vpop.xlane.xlu0 %1287
    %v1289 = vsel %vm95, %v1267, -inf
    %1290 = vmax.xlane.f32.xlu0 %v1289
    %v1291 = vpop.xlane.xlu0 %1290
    %v1292 = vsub.f32 %v1260, %v1270
    %v1293 = vsub.f32 %v1261, %v1273
    %v1294 = vsub.f32 %v1262, %v1276
    %v1295 = vsub.f32 %v1263, %v1279
    %v1296 = vsub.f32 %v1264, %v1282
    %v1297 = vsub.f32 %v1265, %v1285
    %v1298 = vsub.f32 %v1266, %v1288
    %v1299 = vsub.f32 %v1267, %v1291
    %v1300 = vmul.f32 %v1292, 1.442695
    %v1301 = vpow.pop %v1300
    %v1302 = vmul.f32 %v1293, 1.442695
    %v1303 = vpow.pop %v1302
    %v1304 = vmul.f32 %v1294, 1.442695
    %v1305 = vpow.pop %v1304
    %v1306 = vmul.f32 %v1295, 1.442695
    %v1307 = vpow.pop %v1306
    %v1308 = vmul.f32 %v1296, 1.442695
    %v1309 = vpow.pop %v1308
    %v1310 = vmul.f32 %v1297, 1.442695
    %v1311 = vpow.pop %v1310
    %v1312 = vmul.f32 %v1298, 1.442695
    %v1313 = vpow.pop %v1312
    %v1314 = vmul.f32 %v1299, 1.442695
    %v1315 = vpow.pop %v1314
    %v1316 = vsel %vm95, %v1301, 0.0
    %1317 = vadd.xlane.f32.xlu0 %v1316
    %v1318 = vpop.xlane.xlu0 %1317
    %v1319 = vsel %vm95, %v1303, 0.0
    %1320 = vadd.xlane.f32.xlu0 %v1319
    %v1321 = vpop.xlane.xlu0 %1320
    %v1322 = vsel %vm95, %v1305, 0.0
    %1323 = vadd.xlane.f32.xlu0 %v1322
    %v1324 = vpop.xlane.xlu0 %1323
    %v1325 = vsel %vm95, %v1307, 0.0
    %1326 = vadd.xlane.f32.xlu0 %v1325
    %v1327 = vpop.xlane.xlu0 %1326
    %v1328 = vsel %vm95, %v1309, 0.0
    %1329 = vadd.xlane.f32.xlu0 %v1328
    %v1330 = vpop.xlane.xlu0 %1329
    %v1331 = vsel %vm95, %v1311, 0.0
    %1332 = vadd.xlane.f32.xlu0 %v1331
    %v1333 = vpop.xlane.xlu0 %1332
    %v1334 = vsel %vm95, %v1313, 0.0
    %1335 = vadd.xlane.f32.xlu0 %v1334
    %v1336 = vpop.xlane.xlu0 %1335
    %v1337 = vsel %vm95, %v1315, 0.0
    %1338 = vadd.xlane.f32.xlu0 %v1337
    %v1339 = vpop.xlane.xlu0 %1338
    %v1340 = vrcp.pop %v1318
    %v1341 = vrcp.pop %v1321
    %v1342 = vrcp.pop %v1324
    %v1343 = vrcp.pop %v1327
    %v1344 = vrcp.pop %v1330
    %v1345 = vrcp.pop %v1333
    %v1346 = vrcp.pop %v1336
    %v1347 = vrcp.pop %v1339
    %v1348 = vmul.f32 %v1340, 5.0
    %v1349 = vmul.f32 %v1341, 5.0
    %v1350 = vmul.f32 %v1342, 5.0
    %v1351 = vmul.f32 %v1343, 5.0
    %v1352 = vmul.f32 %v1344, 5.0
    %v1353 = vmul.f32 %v1345, 5.0
    %v1354 = vmul.f32 %v1346, 5.0
    %v1355 = vmul.f32 %v1347, 5.0
    %v1356 = vadd.s32 %v1191, 2147483648
    %vm1358 = vcmp.ge.s32.totalorder %v1356, 1288490189
    %v1359 = vadd.s32 %v1192, 2147483648
    %vm1361 = vcmp.ge.s32.totalorder %v1359, 1288490189
    %v1362 = vadd.s32 %v1193, 2147483648
    %vm1364 = vcmp.ge.s32.totalorder %v1362, 1288490189
    %v1365 = vadd.s32 %v1194, 2147483648
    %vm1367 = vcmp.ge.s32.totalorder %v1365, 1288490189
    %v1368 = vadd.s32 %v1195, 2147483648
    %vm1370 = vcmp.ge.s32.totalorder %v1368, 1288490189
    %v1371 = vadd.s32 %v1196, 2147483648
    %vm1373 = vcmp.ge.s32.totalorder %v1371, 1288490189
    %v1374 = vadd.s32 %v1197, 2147483648
    %vm1376 = vcmp.ge.s32.totalorder %v1374, 1288490189
    %v1377 = vadd.s32 %v1198, 2147483648
    %vm1379 = vcmp.ge.s32.totalorder %v1377, 1288490189
    %v1380 = vsel %vm1358, %v1301, 0.0
    %v1381 = vsel %vm1361, %v1303, 0.0
    %v1382 = vsel %vm1364, %v1305, 0.0
    %v1383 = vsel %vm1367, %v1307, 0.0
    %v1384 = vsel %vm1370, %v1309, 0.0
    %v1385 = vsel %vm1373, %v1311, 0.0
    %v1386 = vsel %vm1376, %v1313, 0.0
    %v1387 = vsel %vm1379, %v1315, 0.0
    %v1388 = vpack.c.bf16 %v1381, %v1380
    %v1389 = vpack.c.bf16 %v1383, %v1382
    %v1390 = vpack.c.bf16 %v1385, %v1384
    %v1391 = vpack.c.bf16 %v1387, %v1386
    %v1393 = vsel %vm95, %v1388, 0
    %v1396 = vsel %vm95, %v1389, 0
    %v1399 = vsel %vm95, %v1390, 0
    %v1402 = vsel %vm95, %v1391, 0
    %1404 = vmatpush.bf16.msra.mxu0 0
    %1405 = vmatpush.bf16.msra.mxu0 0
    %1406 = vmatpush.bf16.msra.mxu0 0
    %1407 = vmatpush.bf16.msra.mxu0 0
    %1408 = vmatpush.bf16.msra.mxu0 %v1206
    %1409 = vmatpush.bf16.msra.mxu0 %v1205
    %1410 = vmatpush.bf16.msra.mxu0 %v1204
    %1411 = vmatpush.bf16.msra.mxu0 %v1203
    %1412 = vmatmul.bf16.gmra.mxu0 %v1393
    %v1413 = vpop.f32.mrf.mxu0
    %v1414 = vadd.f32 0.0, %v1413
    %v1415 = vpop.f32.mrf.mxu0
    %v1416 = vadd.f32 0.0, %v1415
    %1417 = vmatmul.bf16.gmra.mxu0 %v1396
    %v1418 = vpop.f32.mrf.mxu0
    %v1419 = vadd.f32 0.0, %v1418
    %v1420 = vpop.f32.mrf.mxu0
    %v1421 = vadd.f32 0.0, %v1420
    %1422 = vmatmul.bf16.gmra.mxu0 %v1399
    %v1423 = vpop.f32.mrf.mxu0
    %v1424 = vadd.f32 0.0, %v1423
    %v1425 = vpop.f32.mrf.mxu0
    %v1426 = vadd.f32 0.0, %v1425
    %1427 = vmatmul.bf16.gmra.mxu0 %v1402
    %v1428 = vpop.f32.mrf.mxu0
    %v1429 = vadd.f32 0.0, %v1428
    %v1430 = vpop.f32.mrf.mxu0
    %v1431 = vadd.f32 0.0, %v1430
    %1432 = vdwg.mxu0
    %v1433 = vmul.f32 %v1414, %v1348
    %v1434 = vmul.f32 %v1416, %v1349
    %v1435 = vmul.f32 %v1419, %v1350
    %v1436 = vmul.f32 %v1421, %v1351
    %v1437 = vmul.f32 %v1424, %v1352
    %v1438 = vmul.f32 %v1426, %v1353
    %v1439 = vmul.f32 %v1429, %v1354
    %v1440 = vmul.f32 %v1431, %v1355
    %s1441 = scalar_lea.vmem [#allocation8], 256
    %1442 = vst.msk [vmem:[%s1441] sm:$0xff] %vm95, %v1433
    %1443 = vst.msk [vmem:[%s1441 + $0x8] sm:$0xff] %vm95, %v1434
    %1444 = vst.msk [vmem:[%s1441 + $0x10] sm:$0xff] %vm95, %v1435
    %1445 = vst.msk [vmem:[%s1441 + $0x18] sm:$0xff] %vm95, %v1436
    %1446 = vst.msk [vmem:[%s1441 + $0x20] sm:$0xff] %vm95, %v1437
    %1447 = vst.msk [vmem:[%s1441 + $0x28] sm:$0xff] %vm95, %v1438
    %1448 = vst.msk [vmem:[%s1441 + $0x30] sm:$0xff] %vm95, %v1439
    %1449 = vst.msk [vmem:[%s1441 + $0x38] sm:$0xff] %vm95, %v1440
    %s1450 = scalar_lea.vmem [#allocation2], 320
    %v1451 = vld [vmem:[%s1450] sm:$0xff]
    %v1452 = vld [vmem:[%s1450 + $0x8] sm:$0xff]
    %v1453 = vld [vmem:[%s1450 + $0x10] sm:$0xff]
    %v1454 = vld [vmem:[%s1450 + $0x18] sm:$0xff]
    %v1455 = vld [vmem:[%s1450 + $0x20] sm:$0xff]
    %v1456 = vld [vmem:[%s1450 + $0x28] sm:$0xff]
    %v1457 = vld [vmem:[%s1450 + $0x30] sm:$0xff]
    %v1458 = vld [vmem:[%s1450 + $0x38] sm:$0xff]
    %s1459 = scalar_lea.vmem [#allocation5], 320
    %v1460 = vld [vmem:[%s1459] sm:$0xff]
    %v1461 = vld [vmem:[%s1459 + $0x8] sm:$0xff]
    %v1462 = vld [vmem:[%s1459 + $0x10] sm:$0xff]
    %v1463 = vld [vmem:[%s1459 + $0x18] sm:$0xff]
    %v1464 = vld [vmem:[%s1459 + $0x20] sm:$0xff]
    %v1465 = vld [vmem:[%s1459 + $0x28] sm:$0xff]
    %v1466 = vld [vmem:[%s1459 + $0x30] sm:$0xff]
    %v1467 = vld [vmem:[%s1459 + $0x38] sm:$0xff]
    %s1468 = scalar_lea.vmem [#allocation7], 320
    %v1469 = vld [vmem:[%s1468] sm:$0xff]
    %v1470 = vld [vmem:[%s1468 + $0x8] sm:$0xff]
    %v1471 = vld [vmem:[%s1468 + $0x10] sm:$0xff]
    %v1472 = vld [vmem:[%s1468 + $0x18] sm:$0xff]
    %v1473 = vld [vmem:[%s1468 + $0x20] sm:$0xff]
    %v1474 = vld [vmem:[%s1468 + $0x28] sm:$0xff]
    %v1475 = vld [vmem:[%s1468 + $0x30] sm:$0xff]
    %v1476 = vld [vmem:[%s1468 + $0x38] sm:$0xff]
    %v1477 = vpack.c.bf16 %v1452, %v1451
    %v1478 = vpack.c.bf16 %v1454, %v1453
    %v1479 = vpack.c.bf16 %v1456, %v1455
    %v1480 = vpack.c.bf16 %v1458, %v1457
    %v1481 = vpack.c.bf16 %v1461, %v1460
    %v1482 = vpack.c.bf16 %v1463, %v1462
    %v1483 = vpack.c.bf16 %v1465, %v1464
    %v1484 = vpack.c.bf16 %v1467, %v1466
    %v1486 = vsel %vm95, %v1477, 0
    %v1489 = vsel %vm95, %v1478, 0
    %v1492 = vsel %vm95, %v1479, 0
    %v1495 = vsel %vm95, %v1480, 0
    %v1498 = vsel %vm95, %v1481, 0
    %v1501 = vsel %vm95, %v1482, 0
    %v1504 = vsel %vm95, %v1483, 0
    %v1507 = vsel %vm95, %v1484, 0
    %1509 = vmatpush.bf16.xpose.msra.mxu0 0
    %1510 = vmatpush.bf16.xpose.msra.mxu0 0
    %1511 = vmatpush.bf16.xpose.msra.mxu0 0
    %1512 = vmatpush.bf16.xpose.msra.mxu0 0
    %1513 = vmatpush.bf16.xpose.msra.mxu0 %v1507
    %1514 = vmatpush.bf16.xpose.msra.mxu0 %v1504
    %1515 = vmatpush.bf16.xpose.msra.mxu0 %v1501
    %1516 = vmatpush.bf16.xpose.msra.mxu0 %v1498
    %1517 = vmatmul.bf16.gmra.mxu0 %v1486
    %v1518 = vpop.f32.mrf.mxu0
    %v1519 = vadd.f32 0.0, %v1518
    %v1520 = vpop.f32.mrf.mxu0
    %v1521 = vadd.f32 0.0, %v1520
    %1522 = vmatmul.bf16.gmra.mxu0 %v1489
    %v1523 = vpop.f32.mrf.mxu0
    %v1524 = vadd.f32 0.0, %v1523
    %v1525 = vpop.f32.mrf.mxu0
    %v1526 = vadd.f32 0.0, %v1525
    %1527 = vmatmul.bf16.gmra.mxu0 %v1492
    %v1528 = vpop.f32.mrf.mxu0
    %v1529 = vadd.f32 0.0, %v1528
    %v1530 = vpop.f32.mrf.mxu0
    %v1531 = vadd.f32 0.0, %v1530
    %1532 = vmatmul.bf16.gmra.mxu0 %v1495
    %v1533 = vpop.f32.mrf.mxu0
    %v1534 = vadd.f32 0.0, %v1533
    %v1535 = vpop.f32.mrf.mxu0
    %v1536 = vadd.f32 0.0, %v1535
    %1537 = vdwg.mxu0
    %v1538 = vmul.f32 %v1519, 0.20452644
    %v1539 = vmul.f32 %v1521, 0.20452644
    %v1540 = vmul.f32 %v1524, 0.20452644
    %v1541 = vmul.f32 %v1526, 0.20452644
    %v1542 = vmul.f32 %v1529, 0.20452644
    %v1543 = vmul.f32 %v1531, 0.20452644
    %v1544 = vmul.f32 %v1534, 0.20452644
    %v1545 = vmul.f32 %v1536, 0.20452644
    %v1546 = vsel %vm95, %v1538, -inf
    %1547 = vmax.xlane.f32.xlu0 %v1546
    %v1548 = vpop.xlane.xlu0 %1547
    %v1549 = vsel %vm95, %v1539, -inf
    %1550 = vmax.xlane.f32.xlu0 %v1549
    %v1551 = vpop.xlane.xlu0 %1550
    %v1552 = vsel %vm95, %v1540, -inf
    %1553 = vmax.xlane.f32.xlu0 %v1552
    %v1554 = vpop.xlane.xlu0 %1553
    %v1555 = vsel %vm95, %v1541, -inf
    %1556 = vmax.xlane.f32.xlu0 %v1555
    %v1557 = vpop.xlane.xlu0 %1556
    %v1558 = vsel %vm95, %v1542, -inf
    %1559 = vmax.xlane.f32.xlu0 %v1558
    %v1560 = vpop.xlane.xlu0 %1559
    %v1561 = vsel %vm95, %v1543, -inf
    %1562 = vmax.xlane.f32.xlu0 %v1561
    %v1563 = vpop.xlane.xlu0 %1562
    %v1564 = vsel %vm95, %v1544, -inf
    %1565 = vmax.xlane.f32.xlu0 %v1564
    %v1566 = vpop.xlane.xlu0 %1565
    %v1567 = vsel %vm95, %v1545, -inf
    %1568 = vmax.xlane.f32.xlu0 %v1567
    %v1569 = vpop.xlane.xlu0 %1568
    %v1570 = vsub.f32 %v1538, %v1548
    %v1571 = vsub.f32 %v1539, %v1551
    %v1572 = vsub.f32 %v1540, %v1554
    %v1573 = vsub.f32 %v1541, %v1557
    %v1574 = vsub.f32 %v1542, %v1560
    %v1575 = vsub.f32 %v1543, %v1563
    %v1576 = vsub.f32 %v1544, %v1566
    %v1577 = vsub.f32 %v1545, %v1569
    %v1578 = vmul.f32 %v1570, 1.442695
    %v1579 = vpow.pop %v1578
    %v1580 = vmul.f32 %v1571, 1.442695
    %v1581 = vpow.pop %v1580
    %v1582 = vmul.f32 %v1572, 1.442695
    %v1583 = vpow.pop %v1582
    %v1584 = vmul.f32 %v1573, 1.442695
    %v1585 = vpow.pop %v1584
    %v1586 = vmul.f32 %v1574, 1.442695
    %v1587 = vpow.pop %v1586
    %v1588 = vmul.f32 %v1575, 1.442695
    %v1589 = vpow.pop %v1588
    %v1590 = vmul.f32 %v1576, 1.442695
    %v1591 = vpow.pop %v1590
    %v1592 = vmul.f32 %v1577, 1.442695
    %v1593 = vpow.pop %v1592
    %v1594 = vsel %vm95, %v1579, 0.0
    %1595 = vadd.xlane.f32.xlu0 %v1594
    %v1596 = vpop.xlane.xlu0 %1595
    %v1597 = vsel %vm95, %v1581, 0.0
    %1598 = vadd.xlane.f32.xlu0 %v1597
    %v1599 = vpop.xlane.xlu0 %1598
    %v1600 = vsel %vm95, %v1583, 0.0
    %1601 = vadd.xlane.f32.xlu0 %v1600
    %v1602 = vpop.xlane.xlu0 %1601
    %v1603 = vsel %vm95, %v1585, 0.0
    %1604 = vadd.xlane.f32.xlu0 %v1603
    %v1605 = vpop.xlane.xlu0 %1604
    %v1606 = vsel %vm95, %v1587, 0.0
    %1607 = vadd.xlane.f32.xlu0 %v1606
    %v1608 = vpop.xlane.xlu0 %1607
    %v1609 = vsel %vm95, %v1589, 0.0
    %1610 = vadd.xlane.f32.xlu0 %v1609
    %v1611 = vpop.xlane.xlu0 %1610
    %v1612 = vsel %vm95, %v1591, 0.0
    %1613 = vadd.xlane.f32.xlu0 %v1612
    %v1614 = vpop.xlane.xlu0 %1613
    %v1615 = vsel %vm95, %v1593, 0.0
    %1616 = vadd.xlane.f32.xlu0 %v1615
    %v1617 = vpop.xlane.xlu0 %1616
    %v1618 = vrcp.pop %v1596
    %v1619 = vrcp.pop %v1599
    %v1620 = vrcp.pop %v1602
    %v1621 = vrcp.pop %v1605
    %v1622 = vrcp.pop %v1608
    %v1623 = vrcp.pop %v1611
    %v1624 = vrcp.pop %v1614
    %v1625 = vrcp.pop %v1617
    %v1626 = vmul.f32 %v1618, 5.0
    %v1627 = vmul.f32 %v1619, 5.0
    %v1628 = vmul.f32 %v1620, 5.0
    %v1629 = vmul.f32 %v1621, 5.0
    %v1630 = vmul.f32 %v1622, 5.0
    %v1631 = vmul.f32 %v1623, 5.0
    %v1632 = vmul.f32 %v1624, 5.0
    %v1633 = vmul.f32 %v1625, 5.0
    %v1634 = vadd.s32 %v1469, 2147483648
    %vm1636 = vcmp.ge.s32.totalorder %v1634, 1288490189
    %v1637 = vadd.s32 %v1470, 2147483648
    %vm1639 = vcmp.ge.s32.totalorder %v1637, 1288490189
    %v1640 = vadd.s32 %v1471, 2147483648
    %vm1642 = vcmp.ge.s32.totalorder %v1640, 1288490189
    %v1643 = vadd.s32 %v1472, 2147483648
    %vm1645 = vcmp.ge.s32.totalorder %v1643, 1288490189
    %v1646 = vadd.s32 %v1473, 2147483648
    %vm1648 = vcmp.ge.s32.totalorder %v1646, 1288490189
    %v1649 = vadd.s32 %v1474, 2147483648
    %vm1651 = vcmp.ge.s32.totalorder %v1649, 1288490189
    %v1652 = vadd.s32 %v1475, 2147483648
    %vm1654 = vcmp.ge.s32.totalorder %v1652, 1288490189
    %v1655 = vadd.s32 %v1476, 2147483648
    %vm1657 = vcmp.ge.s32.totalorder %v1655, 1288490189
    %v1658 = vsel %vm1636, %v1579, 0.0
    %v1659 = vsel %vm1639, %v1581, 0.0
    %v1660 = vsel %vm1642, %v1583, 0.0
    %v1661 = vsel %vm1645, %v1585, 0.0
    %v1662 = vsel %vm1648, %v1587, 0.0
    %v1663 = vsel %vm1651, %v1589, 0.0
    %v1664 = vsel %vm1654, %v1591, 0.0
    %v1665 = vsel %vm1657, %v1593, 0.0
    %v1666 = vpack.c.bf16 %v1659, %v1658
    %v1667 = vpack.c.bf16 %v1661, %v1660
    %v1668 = vpack.c.bf16 %v1663, %v1662
    %v1669 = vpack.c.bf16 %v1665, %v1664
    %v1671 = vsel %vm95, %v1666, 0
    %v1674 = vsel %vm95, %v1667, 0
    %v1677 = vsel %vm95, %v1668, 0
    %v1680 = vsel %vm95, %v1669, 0
    %1682 = vmatpush.bf16.msra.mxu0 0
    %1683 = vmatpush.bf16.msra.mxu0 0
    %1684 = vmatpush.bf16.msra.mxu0 0
    %1685 = vmatpush.bf16.msra.mxu0 0
    %1686 = vmatpush.bf16.msra.mxu0 %v1484
    %1687 = vmatpush.bf16.msra.mxu0 %v1483
    %1688 = vmatpush.bf16.msra.mxu0 %v1482
    %1689 = vmatpush.bf16.msra.mxu0 %v1481
    %1690 = vmatmul.bf16.gmra.mxu0 %v1671
    %v1691 = vpop.f32.mrf.mxu0
    %v1692 = vadd.f32 0.0, %v1691
    %v1693 = vpop.f32.mrf.mxu0
    %v1694 = vadd.f32 0.0, %v1693
    %1695 = vmatmul.bf16.gmra.mxu0 %v1674
    %v1696 = vpop.f32.mrf.mxu0
    %v1697 = vadd.f32 0.0, %v1696
    %v1698 = vpop.f32.mrf.mxu0
    %v1699 = vadd.f32 0.0, %v1698
    %1700 = vmatmul.bf16.gmra.mxu0 %v1677
    %v1701 = vpop.f32.mrf.mxu0
    %v1702 = vadd.f32 0.0, %v1701
    %v1703 = vpop.f32.mrf.mxu0
    %v1704 = vadd.f32 0.0, %v1703
    %1705 = vmatmul.bf16.gmra.mxu0 %v1680
    %v1706 = vpop.f32.mrf.mxu0
    %v1707 = vadd.f32 0.0, %v1706
    %v1708 = vpop.f32.mrf.mxu0
    %v1709 = vadd.f32 0.0, %v1708
    %1710 = vdwg.mxu0
    %v1711 = vmul.f32 %v1692, %v1626
    %v1712 = vmul.f32 %v1694, %v1627
    %v1713 = vmul.f32 %v1697, %v1628
    %v1714 = vmul.f32 %v1699, %v1629
    %v1715 = vmul.f32 %v1702, %v1630
    %v1716 = vmul.f32 %v1704, %v1631
    %v1717 = vmul.f32 %v1707, %v1632
    %v1718 = vmul.f32 %v1709, %v1633
    %s1719 = scalar_lea.vmem [#allocation8], 320
    %1720 = vst.msk [vmem:[%s1719] sm:$0xff] %vm95, %v1711
    %1721 = vst.msk [vmem:[%s1719 + $0x8] sm:$0xff] %vm95, %v1712
    %1722 = vst.msk [vmem:[%s1719 + $0x10] sm:$0xff] %vm95, %v1713
    %1723 = vst.msk [vmem:[%s1719 + $0x18] sm:$0xff] %vm95, %v1714
    %1724 = vst.msk [vmem:[%s1719 + $0x20] sm:$0xff] %vm95, %v1715
    %1725 = vst.msk [vmem:[%s1719 + $0x28] sm:$0xff] %vm95, %v1716
    %1726 = vst.msk [vmem:[%s1719 + $0x30] sm:$0xff] %vm95, %v1717
    %1727 = vst.msk [vmem:[%s1719 + $0x38] sm:$0xff] %vm95, %v1718
    // Predicated region
    $region26: #{tpu_custom_call.1} parent=1 // pred_check
      _
    $region27: #{tpu_custom_call.1} parent=1 // pred_check_branch
      %1729 = sbr.rel (0) target = $region29
    $region28: #{tpu_custom_call.1} parent=1 // pred_region
      %1731 = vsyncadd [#allocation4], 0
      %s1732 = sshll.u32 [#allocation8], 4
      %s1733 = int_to_ptr.vmem [resolvable:$true] %s1732
      %s1734 = sshll.u32 %s3, 4
      %s1735 = int_to_ptr.hbm [resolvable:$true] %s1734
      %1740 = dma.vmem_to_hbm [thread:$0]  %s1733, 6144, %s1735, [#allocation4], 128, 128, 8
    $region29: #{tpu_custom_call.1} parent=1 // pred_fallthru
      _
    // Predicated region
    $region30: #{tpu_custom_call.1} parent=1 // pred_check
      _
    $region31: #{tpu_custom_call.1} parent=1 // pred_check_branch
      %1742 = sbr.rel (0) target = $region33
    $region32: #{tpu_custom_call.1} parent=1 // pred_region
      %1744 = dma.done [#allocation4], 6144
    $region33: #{tpu_custom_call.1} parent=1 // pred_fallthru
      _
    %1745 = vsyncpa [#allocation3], 1
    %1746 = vsyncpa [#allocation6], 1
    %1747 = vsyncpa [#allocation4], 1

</llo_original>
